<compile_context>
chip_gen: v7x
topology: tpu7x:2x2x1
jax: 0.10.0
libtpu: 0.0.40
codegen_flags: <defaults>
</compile_context>

<pallas_src>
import functools

import jax
import jax.numpy as jnp
from jax.experimental import pallas as pl
from jax.experimental.pallas import tpu as pltpu

# Original model dims
D_IN = 2
H1, H2, H3, H4, D_OUT = 224, 64, 64, 320, 2
# Lane-friendly padded dims used inside the kernel (padding is zeros -> math unchanged)
H1P, H4P = 256, 384
MXU_N = 128        # padded column count for the final MXU matmul
D_OUT_W = 8        # HBM output width (== full array last dim; wrapper slices [:, :2])

_HI = jax.lax.Precision.HIGHEST


def _softplus(x):
    # Matches torch.nn.Softplus(beta=1, threshold=20)
    return jnp.where(x > 20.0, x, jnp.log1p(jnp.exp(jnp.minimum(x, 20.0))))


def _round_up(n, m):
    return ((n + m - 1) // m) * m


def tline_kernel(x_ref, w1_ref, b1_ref, w2_ref, b2_ref, w34_ref, b34_ref,
                 w5_ref, b5_ref, out_ref):
    x = x_ref[...].astype(jnp.float32)                      # (TB, 2)

    # Layer 1: scaler already folded into (w1, b1). K=2 -> VPU broadcast-MACs,
    # skipping an MXU push/pop round-trip for 2 MACs per output.
    w1 = w1_ref[...]                                        # (2, 256)
    h = x[:, 0:1] * w1[0:1, :] + x[:, 1:2] * w1[1:2, :] + b1_ref[...]
    h = jnp.maximum(h, 0.0)

    # Linear(256p, 64) + ReLU
    h = jnp.dot(h, w2_ref[...], preferred_element_type=jnp.float32) + b2_ref[...]
    h = jnp.maximum(h, 0.0)

    # Linear(64, 64) folded into Linear(64, 384p) offline -> single matmul + ReLU
    h = jnp.dot(h, w34_ref[...], preferred_element_type=jnp.float32) + b34_ref[...]
    h = jnp.maximum(h, 0.0)

    # Linear(384p, 128p) + Softplus; only the first 2 lanes are meaningful.
    # Lanes 2..7 of the stored block carry softplus(0)=log(2) and are sliced off
    # by the wrapper — do NOT widen the wrapper slice without zeroing them here.
    h = jnp.dot(h, w5_ref[...], preferred_element_type=jnp.float32) + b5_ref[...]
    out_ref[...] = _softplus(h[:, :D_OUT_W]).astype(out_ref.dtype)


def prepare_kernel_params(params):
    """Fold the MinMaxScaler into (w1, b1), fold Linear3 into Linear4, zero-pad.

    Input params follow the PyTorch module (weights pre-transposed to (in, out),
    biases (1, out), scaler buffers (1, 2)).
    NOTE: if any feature has max == min the scaler fold divides by zero (same
    behaviour as the unfused PyTorch module, just baked in at prep time).
    """
    (min_v, max_v, w1, b1, w2, b2, w3, b3, w4, b4, w5, b5) = params
    scale = 1.0 / (max_v - min_v)                  # (1, 2)
    shift = -min_v * scale                         # (1, 2)
    w1f = w1 * scale.reshape(D_IN, 1)              # (2, 224)
    b1f = b1 + jnp.dot(shift, w1, precision=_HI)   # (1, 224)

    # Linear3 has no activation after it -> fold into Linear4 (exact math).
    w34 = jnp.dot(w3, w4, precision=_HI)           # (64, 320)
    b34 = jnp.dot(b3, w4, precision=_HI) + b4      # (1, 320)

    w1p = jnp.zeros((D_IN, H1P), jnp.float32).at[:, :H1].set(w1f)
    b1p = jnp.zeros((1, H1P), jnp.float32).at[:, :H1].set(b1f)
    w2p = jnp.zeros((H1P, H2), jnp.float32).at[:H1, :].set(w2)
    w34p = jnp.zeros((H2, H4P), jnp.float32).at[:, :H4].set(w34)
    b34p = jnp.zeros((1, H4P), jnp.float32).at[:, :H4].set(b34)
    w5p = jnp.zeros((H4P, MXU_N), jnp.float32).at[:H4, :D_OUT].set(w5)
    b5p = jnp.zeros((1, MXU_N), jnp.float32).at[:, :D_OUT].set(b5)
    return (w1p, b1p, w2p, b2, w34p, b34p, w5p, b5p)


@functools.partial(jax.jit, static_argnames=("tb", "min_grid_steps"))
def tline_forward(x, kparams, *, tb=2048, min_grid_steps=1):
    """x: (B, 2) -> (B, 2). kparams from prepare_kernel_params().

    tb: batch-tile cap (rounded to a multiple of 8). 2048 is a safe default for
        v5e/v6e/v7x; on v6e up to 4096 is fine.
    min_grid_steps: set to 2 on v7x so dimension_semantics=("parallel",) can
        shard the batch axis across its two TensorCores.
    """
    B = x.shape[0]
    B8 = _round_up(max(B, 1), 8)
    tb8 = _round_up(max(int(tb), 8), 8)
    TB = min(tb8, B8)                              # small batches: single grid step
    if min_grid_steps > 1:
        TB = min(TB, _round_up(-(-B8 // int(min_grid_steps)), 8))
    Bp = _round_up(B8, TB)

    xp = x.astype(jnp.float32)
    if Bp != B:
        xp = jnp.pad(xp, ((0, Bp - B), (0, 0)))    # zero rows, discarded below
    grid = (Bp // TB,)

    x_spec = pl.BlockSpec((TB, D_IN), lambda i: (i, 0))
    # Weights/biases: full-array blocks, constant index map -> VMEM-resident
    # (fetched once; re-DMA is skipped because the block index never changes).
    weight_specs = [pl.BlockSpec(p.shape, lambda i: (0, 0)) for p in kparams]
    out_spec = pl.BlockSpec((TB, D_OUT_W), lambda i: (i, 0))

    weight_bytes = sum(int(p.size) * 4 for p in kparams)
    flops = 2 * B * (D_IN * H1 + H1 * H2 + H2 * H4 + H4 * D_OUT)
    cost = pl.CostEstimate(
        flops=flops,
        transcendentals=2 * B * D_OUT_W,
        bytes_accessed=B * (D_IN + D_OUT_W) * 4 + weight_bytes,
    )

    # VMEM budget: resident weights (double-buffered worst case), double-buffered
    # x/out tiles, live fp32 activations, 2x headroom, 8 MiB floor, <=100 MiB cap.
    tile_bytes = 2 * TB * (D_IN + D_OUT_W) * 4
    act_bytes = TB * (H1P + H2 + H4P + MXU_N) * 4
    vmem_limit = int(min(max(2 * (2 * weight_bytes + tile_bytes + act_bytes),
                             8 << 20), 100 << 20))

    out_padded = pl.pallas_call(
        tline_kernel,
        grid=grid,
        in_specs=[x_spec] + weight_specs,
        out_specs=out_spec,
        out_shape=jax.ShapeDtypeStruct((Bp, D_OUT_W), jnp.float32),
        compiler_params=pltpu.CompilerParams(
            dimension_semantics=("parallel",),
            vmem_limit_bytes=vmem_limit,
        ),
        cost_estimate=cost,
    )(xp, *kparams)
    return out_padded[:B, :D_OUT]


def init_params(key):
    """Deterministic init mimicking PyTorch Linear default init.

    Weights stored pre-transposed as (in, out); biases as (1, out).
    MinMaxScaler buffers default to min=zeros(2), max=ones(2) as in the module.
    """
    sizes = [(D_IN, H1), (H1, H2), (H2, H3), (H3, H4), (H4, D_OUT)]
    params = [jnp.zeros((1, D_IN), jnp.float32), jnp.ones((1, D_IN), jnp.float32)]
    for (fin, fout) in sizes:
        key, kw, kb = jax.random.split(key, 3)
        bound = 1.0 / (fin ** 0.5)
        w = jax.random.uniform(kw, (fin, fout), jnp.float32, -bound, bound)
        b = jax.random.uniform(kb, (1, fout), jnp.float32, -bound, bound)
        params.extend([w, b])
    return tuple(params)


def tline_reference(x, params):
    """Pure-JAX reference (unfolded, unpadded) for correctness checking."""
    (min_v, max_v, w1, b1, w2, b2, w3, b3, w4, b4, w5, b5) = params
    h = (x - min_v) / (max_v - min_v)
    h = jnp.maximum(jnp.dot(h, w1, precision=_HI) + b1, 0.0)
    h = jnp.maximum(jnp.dot(h, w2, precision=_HI) + b2, 0.0)
    h = jnp.dot(h, w3, precision=_HI) + b3
    h = jnp.maximum(jnp.dot(h, w4, precision=_HI) + b4, 0.0)
    h = jnp.dot(h, w5, precision=_HI) + b5
    return _softplus(h)


if __name__ == "__main__":
    key = jax.random.PRNGKey(0)
    params = init_params(key)
    # Non-trivial scaler buffers to exercise the constant-folded path.
    min_v = jnp.array([[-1.0, -0.5]], jnp.float32)
    max_v = jnp.array([[2.0, 1.5]], jnp.float32)
    params = (min_v, max_v) + params[2:]

    kparams = prepare_kernel_params(params)

    key, kx = jax.random.split(key)
    B = 203                                   # not a multiple of 8 -> row-pad path
    x = jax.random.normal(kx, (B, D_IN), jnp.float32)

    ref = tline_reference(x, params)

    # Default tile: whole batch in a single grid step.
    out = jax.block_until_ready(tline_forward(x, kparams))
    assert out.shape == (B, D_OUT)
    assert jnp.allclose(out, ref, atol=5e-4, rtol=5e-4), "mismatch vs reference (1-step)"

    # Small tile: exercises the multi-step grid + megacore-parallel batch axis.
    out2 = jax.block_until_ready(tline_forward(x, kparams, tb=64))
    assert jnp.allclose(out2, ref, atol=5e-4, rtol=5e-4), "mismatch vs reference (multi-step)"

    print("KERNEL_OK")
</pallas_src>

<mosaic_0001>
module attributes {stable_mosaic.version = 11 : i64} {
  func.func @tline_kernel(%arg0: i32, %arg1: memref<208x2xf32, #tpu.memory_space<vmem>>, %arg2: memref<2x256xf32, #tpu.memory_space<vmem>>, %arg3: memref<1x256xf32, #tpu.memory_space<vmem>>, %arg4: memref<256x64xf32, #tpu.memory_space<vmem>>, %arg5: memref<1x64xf32, #tpu.memory_space<vmem>>, %arg6: memref<64x384xf32, #tpu.memory_space<vmem>>, %arg7: memref<1x384xf32, #tpu.memory_space<vmem>>, %arg8: memref<384x128xf32, #tpu.memory_space<vmem>>, %arg9: memref<1x128xf32, #tpu.memory_space<vmem>>, %arg10: memref<208x8xf32, #tpu.memory_space<vmem>>) attributes {dimension_semantics = [#tpu.dimension_semantics<parallel>], iteration_bounds = array<i64: 1>, scalar_prefetch = 0 : i64, scratch_operands = 0 : i64, tpu.core_type = #tpu.core_type<tc>, window_params = [{transform_indices = @transform_0, window_bounds = array<i64: 208, 2>}, {pipeline_mode = #tpu.pipeline_mode<synchronous>, transform_indices = @transform_1, window_bounds = array<i64: 2, 256>}, {pipeline_mode = #tpu.pipeline_mode<synchronous>, transform_indices = @transform_2, window_bounds = array<i64: 1, 256>}, {pipeline_mode = #tpu.pipeline_mode<synchronous>, transform_indices = @transform_3, window_bounds = array<i64: 256, 64>}, {pipeline_mode = #tpu.pipeline_mode<synchronous>, transform_indices = @transform_4, window_bounds = array<i64: 1, 64>}, {pipeline_mode = #tpu.pipeline_mode<synchronous>, transform_indices = @transform_5, window_bounds = array<i64: 64, 384>}, {pipeline_mode = #tpu.pipeline_mode<synchronous>, transform_indices = @transform_6, window_bounds = array<i64: 1, 384>}, {pipeline_mode = #tpu.pipeline_mode<synchronous>, transform_indices = @transform_7, window_bounds = array<i64: 384, 128>}, {pipeline_mode = #tpu.pipeline_mode<synchronous>, transform_indices = @transform_8, window_bounds = array<i64: 1, 128>}, {transform_indices = @transform_9, window_bounds = array<i64: 208, 8>}]} {
    %c0 = arith.constant 0 : index
    %c0_0 = arith.constant 0 : index
    %0 = vector.load %arg1[%c0, %c0_0] : memref<208x2xf32, #tpu.memory_space<vmem>>, vector<208x2xf32>
    %c0_1 = arith.constant 0 : index
    %c0_2 = arith.constant 0 : index
    %1 = vector.load %arg2[%c0_1, %c0_2] : memref<2x256xf32, #tpu.memory_space<vmem>>, vector<2x256xf32>
    %2 = vector.extract_strided_slice %0 {offsets = [0, 0], sizes = [208, 1], strides = [1, 1]} : vector<208x2xf32> to vector<208x1xf32>
    %3 = vector.extract_strided_slice %1 {offsets = [0, 0], sizes = [1, 256], strides = [1, 1]} : vector<2x256xf32> to vector<1x256xf32>
    %4 = vector.broadcast %2 : vector<208x1xf32> to vector<208x256xf32>
    %5 = vector.broadcast %3 : vector<1x256xf32> to vector<208x256xf32>
    %6 = arith.mulf %4, %5 : vector<208x256xf32>
    %7 = vector.extract_strided_slice %0 {offsets = [0, 1], sizes = [208, 1], strides = [1, 1]} : vector<208x2xf32> to vector<208x1xf32>
    %8 = vector.extract_strided_slice %1 {offsets = [1, 0], sizes = [1, 256], strides = [1, 1]} : vector<2x256xf32> to vector<1x256xf32>
    %9 = vector.broadcast %7 : vector<208x1xf32> to vector<208x256xf32>
    %10 = vector.broadcast %8 : vector<1x256xf32> to vector<208x256xf32>
    %11 = arith.mulf %9, %10 : vector<208x256xf32>
    %12 = arith.addf %6, %11 : vector<208x256xf32>
    %c0_3 = arith.constant 0 : index
    %c0_4 = arith.constant 0 : index
    %13 = vector.load %arg3[%c0_3, %c0_4] : memref<1x256xf32, #tpu.memory_space<vmem>>, vector<1x256xf32>
    %14 = vector.broadcast %13 : vector<1x256xf32> to vector<208x256xf32>
    %15 = arith.addf %12, %14 : vector<208x256xf32>
    %cst = arith.constant 0.000000e+00 : f32
    %16 = vector.broadcast %cst : f32 to vector<208x256xf32>
    %17 = arith.maximumf %15, %16 : vector<208x256xf32>
    %c0_5 = arith.constant 0 : index
    %c0_6 = arith.constant 0 : index
    %18 = vector.load %arg4[%c0_5, %c0_6] : memref<256x64xf32, #tpu.memory_space<vmem>>, vector<256x64xf32>
    %cst_7 = arith.constant dense<0.000000e+00> : vector<208x64xf32>
    %19 = tpu.matmul %17, %18, %cst_7 {dimension_numbers = #tpu.dot_dimension_numbers<[1], [0], [0], [1], [0, 0, 1, 1], [], []>} : vector<208x256xf32>, vector<256x64xf32>, vector<208x64xf32> -> vector<208x64xf32>
    %c0_8 = arith.constant 0 : index
    %c0_9 = arith.constant 0 : index
    %20 = vector.load %arg5[%c0_8, %c0_9] : memref<1x64xf32, #tpu.memory_space<vmem>>, vector<1x64xf32>
    %21 = vector.broadcast %20 : vector<1x64xf32> to vector<208x64xf32>
    %22 = arith.addf %19, %21 : vector<208x64xf32>
    %cst_10 = arith.constant 0.000000e+00 : f32
    %23 = vector.broadcast %cst_10 : f32 to vector<208x64xf32>
    %24 = arith.maximumf %22, %23 : vector<208x64xf32>
    %c0_11 = arith.constant 0 : index
    %c0_12 = arith.constant 0 : index
    %25 = vector.load %arg6[%c0_11, %c0_12] : memref<64x384xf32, #tpu.memory_space<vmem>>, vector<64x384xf32>
    %cst_13 = arith.constant dense<0.000000e+00> : vector<208x384xf32>
    %26 = tpu.matmul %24, %25, %cst_13 {dimension_numbers = #tpu.dot_dimension_numbers<[1], [0], [0], [1], [0, 0, 1, 1], [], []>} : vector<208x64xf32>, vector<64x384xf32>, vector<208x384xf32> -> vector<208x384xf32>
    %c0_14 = arith.constant 0 : index
    %c0_15 = arith.constant 0 : index
    %27 = vector.load %arg7[%c0_14, %c0_15] : memref<1x384xf32, #tpu.memory_space<vmem>>, vector<1x384xf32>
    %28 = vector.broadcast %27 : vector<1x384xf32> to vector<208x384xf32>
    %29 = arith.addf %26, %28 : vector<208x384xf32>
    %cst_16 = arith.constant 0.000000e+00 : f32
    %30 = vector.broadcast %cst_16 : f32 to vector<208x384xf32>
    %31 = arith.maximumf %29, %30 : vector<208x384xf32>
    %c0_17 = arith.constant 0 : index
    %c0_18 = arith.constant 0 : index
    %32 = vector.load %arg8[%c0_17, %c0_18] : memref<384x128xf32, #tpu.memory_space<vmem>>, vector<384x128xf32>
    %cst_19 = arith.constant dense<0.000000e+00> : vector<208x128xf32>
    %33 = tpu.matmul %31, %32, %cst_19 {dimension_numbers = #tpu.dot_dimension_numbers<[1], [0], [0], [1], [0, 0, 1, 1], [], []>} : vector<208x384xf32>, vector<384x128xf32>, vector<208x128xf32> -> vector<208x128xf32>
    %c0_20 = arith.constant 0 : index
    %c0_21 = arith.constant 0 : index
    %34 = vector.load %arg9[%c0_20, %c0_21] : memref<1x128xf32, #tpu.memory_space<vmem>>, vector<1x128xf32>
    %35 = vector.broadcast %34 : vector<1x128xf32> to vector<208x128xf32>
    %36 = arith.addf %33, %35 : vector<208x128xf32>
    %37 = vector.extract_strided_slice %36 {offsets = [0, 0], sizes = [208, 8], strides = [1, 1]} : vector<208x128xf32> to vector<208x8xf32>
    %cst_22 = arith.constant 2.000000e+01 : f32
    %38 = vector.broadcast %cst_22 : f32 to vector<208x8xf32>
    %39 = arith.cmpf ogt, %37, %38 : vector<208x8xf32>
    %cst_23 = arith.constant 2.000000e+01 : f32
    %40 = vector.broadcast %cst_23 : f32 to vector<208x8xf32>
    %41 = arith.minimumf %37, %40 : vector<208x8xf32>
    %42 = math.exp %41 : vector<208x8xf32>
    %43 = math.log1p %42 : vector<208x8xf32>
    %44 = arith.select %39, %37, %43 : vector<208x8xi1>, vector<208x8xf32>
    %c0_24 = arith.constant 0 : index
    %c0_25 = arith.constant 0 : index
    %45 = vector.load %arg10[%c0_24, %c0_25] : memref<208x8xf32, #tpu.memory_space<vmem>>, vector<208x8xf32>
    tpu.vector_store %arg10[%c0_24, %c0_25], %44 {strides = array<i32>} : memref<208x8xf32, #tpu.memory_space<vmem>>, vector<208x8xf32>,
    return
  }
  func.func @transform_0(%arg0: i32) -> (i32, i32) {
    %c0_i32 = arith.constant 0 : i32
    %c0_i32_0 = arith.constant 0 : i32
    return %arg0, %c0_i32 : i32, i32
  }
  func.func @transform_1(%arg0: i32) -> (i32, i32) {
    %c0_i32 = arith.constant 0 : i32
    %c0_i32_0 = arith.constant 0 : i32
    %c0_i32_1 = arith.constant 0 : i32
    return %c0_i32, %c0_i32_0 : i32, i32
  }
  func.func @transform_2(%arg0: i32) -> (i32, i32) {
    %c0_i32 = arith.constant 0 : i32
    %c0_i32_0 = arith.constant 0 : i32
    %c0_i32_1 = arith.constant 0 : i32
    return %c0_i32, %c0_i32_0 : i32, i32
  }
  func.func @transform_3(%arg0: i32) -> (i32, i32) {
    %c0_i32 = arith.constant 0 : i32
    %c0_i32_0 = arith.constant 0 : i32
    %c0_i32_1 = arith.constant 0 : i32
    return %c0_i32, %c0_i32_0 : i32, i32
  }
  func.func @transform_4(%arg0: i32) -> (i32, i32) {
    %c0_i32 = arith.constant 0 : i32
    %c0_i32_0 = arith.constant 0 : i32
    %c0_i32_1 = arith.constant 0 : i32
    return %c0_i32, %c0_i32_0 : i32, i32
  }
  func.func @transform_5(%arg0: i32) -> (i32, i32) {
    %c0_i32 = arith.constant 0 : i32
    %c0_i32_0 = arith.constant 0 : i32
    %c0_i32_1 = arith.constant 0 : i32
    return %c0_i32, %c0_i32_0 : i32, i32
  }
  func.func @transform_6(%arg0: i32) -> (i32, i32) {
    %c0_i32 = arith.constant 0 : i32
    %c0_i32_0 = arith.constant 0 : i32
    %c0_i32_1 = arith.constant 0 : i32
    return %c0_i32, %c0_i32_0 : i32, i32
  }
  func.func @transform_7(%arg0: i32) -> (i32, i32) {
    %c0_i32 = arith.constant 0 : i32
    %c0_i32_0 = arith.constant 0 : i32
    %c0_i32_1 = arith.constant 0 : i32
    return %c0_i32, %c0_i32_0 : i32, i32
  }
  func.func @transform_8(%arg0: i32) -> (i32, i32) {
    %c0_i32 = arith.constant 0 : i32
    %c0_i32_0 = arith.constant 0 : i32
    %c0_i32_1 = arith.constant 0 : i32
    return %c0_i32, %c0_i32_0 : i32, i32
  }
  func.func @transform_9(%arg0: i32) -> (i32, i32) {
    %c0_i32 = arith.constant 0 : i32
    %c0_i32_0 = arith.constant 0 : i32
    return %arg0, %c0_i32 : i32, i32
  }
}

</mosaic_0001>

<llo_original>
// kernel: tline_forward.1
$region0: #{tline_forward.1}
  #allocation0 [shape = 'u32[]', space=smem, size = 0x4, offset = 0x4, fixed_abs, tag = 'smem constant byte address 0x4 - core index']
  #allocation1 [shape = 'u32[144,128]{1,0:T(1,128)}', space=vmem, size = 0x12000, scoped, tag = 'internal scratch']
  %s0 = inlined_call_operand.vmem [shape: f32[208,2], index: 0, kind: input, shape index: {}]
  %s1 = inlined_call_operand.vmem [shape: f32[2,256], index: 1, kind: input, shape index: {}]
  %s2 = inlined_call_operand.vmem [shape: f32[1,256], index: 2, kind: input, shape index: {}]
  %s3 = inlined_call_operand.vmem [shape: f32[256,64], index: 3, kind: input, shape index: {}]
  %s4 = inlined_call_operand.vmem [shape: f32[1,64], index: 4, kind: input, shape index: {}]
  %s5 = inlined_call_operand.vmem [shape: f32[64,384], index: 5, kind: input, shape index: {}]
  %s6 = inlined_call_operand.vmem [shape: f32[1,384], index: 6, kind: input, shape index: {}]
  %s7 = inlined_call_operand.vmem [shape: f32[384,128], index: 7, kind: input, shape index: {}]
  %s8 = inlined_call_operand.vmem [shape: f32[1,128], index: 8, kind: input, shape index: {}]
  %s9 = inlined_call_operand.vmem [shape: f32[208,8], index: 9, kind: output, shape index: {}]
  %s10 = sld [smem:[#allocation0]]
  $region46: #{tline_forward.1} parent=0
    _
  %s12 = ssub.s32 1, %s10
  %s13 = scalar_select 0, %s12, %s10
  // Predicated region
  $region2: #{tline_forward.1} parent=0 // pred_check
    _
  $region3: #{tline_forward.1} parent=0 // pred_check_branch
    %15 = sbr.rel (0) target = $region5
  $region4: #{tline_forward.1} parent=0 // pred_region
    _
  $region5: #{tline_forward.1} parent=0 // pred_fallthru
    _
  // Predicated region
  $region6: #{tline_forward.1} parent=0 // pred_check
    _
  $region7: #{tline_forward.1} parent=0 // pred_check_branch
    %17 = sbr.rel (0) target = $region9
  $region8: #{tline_forward.1} parent=0 // pred_region
    _
  $region9: #{tline_forward.1} parent=0 // pred_fallthru
    _
  // Predicated region
  $region10: #{tline_forward.1} parent=0 // pred_check
    _
  $region11: #{tline_forward.1} parent=0 // pred_check_branch
    %19 = sbr.rel (0) target = $region13
  $region12: #{tline_forward.1} parent=0 // pred_region
    _
  $region13: #{tline_forward.1} parent=0 // pred_fallthru
    _
  // Predicated region
  $region14: #{tline_forward.1} parent=0 // pred_check
    _
  $region15: #{tline_forward.1} parent=0 // pred_check_branch
    %21 = sbr.rel (0) target = $region17
  $region16: #{tline_forward.1} parent=0 // pred_region
    _
  $region17: #{tline_forward.1} parent=0 // pred_fallthru
    _
  // Predicated region
  $region18: #{tline_forward.1} parent=0 // pred_check
    _
  $region19: #{tline_forward.1} parent=0 // pred_check_branch
    %23 = sbr.rel (0) target = $region21
  $region20: #{tline_forward.1} parent=0 // pred_region
    _
  $region21: #{tline_forward.1} parent=0 // pred_fallthru
    _
  // Predicated region
  $region22: #{tline_forward.1} parent=0 // pred_check
    _
  $region23: #{tline_forward.1} parent=0 // pred_check_branch
    %25 = sbr.rel (0) target = $region25
  $region24: #{tline_forward.1} parent=0 // pred_region
    _
  $region25: #{tline_forward.1} parent=0 // pred_fallthru
    _
  // Predicated region
  $region26: #{tline_forward.1} parent=0 // pred_check
    _
  $region27: #{tline_forward.1} parent=0 // pred_check_branch
    %27 = sbr.rel (0) target = $region29
  $region28: #{tline_forward.1} parent=0 // pred_region
    _
  $region29: #{tline_forward.1} parent=0 // pred_fallthru
    _
  // Predicated region
  $region30: #{tline_forward.1} parent=0 // pred_check
    _
  $region31: #{tline_forward.1} parent=0 // pred_check_branch
    %29 = sbr.rel (0) target = $region33
  $region32: #{tline_forward.1} parent=0 // pred_region
    _
  $region33: #{tline_forward.1} parent=0 // pred_fallthru
    _
  // Predicated region
  $region34: #{tline_forward.1} parent=0 // pred_check
    _
  $region35: #{tline_forward.1} parent=0 // pred_check_branch
    %31 = sbr.rel (0) target = $region37
  $region36: #{tline_forward.1} parent=0 // pred_region
    _
  $region37: #{tline_forward.1} parent=0 // pred_fallthru
    _
  %v32 = vld [vmem:[%s0] sm:$0xff]
  %v33 = vld [vmem:[%s0 + $0x8] sm:$0xff]
  %v34 = vld [vmem:[%s0 + $0x10] sm:$0xff]
  %v35 = vld [vmem:[%s0 + $0x18] sm:$0xff]
  %v36 = vld [vmem:[%s0 + $0x20] sm:$0xff]
  %v37 = vld [vmem:[%s0 + $0x28] sm:$0xff]
  %v38 = vld [vmem:[%s0 + $0x30] sm:$0xff]
  %v39 = vld [vmem:[%s0 + $0x38] sm:$0xff]
  %v40 = vld [vmem:[%s0 + $0x40] sm:$0xff]
  %v41 = vld [vmem:[%s0 + $0x48] sm:$0xff]
  %v42 = vld [vmem:[%s0 + $0x50] sm:$0xff]
  %v43 = vld [vmem:[%s0 + $0x58] sm:$0xff]
  %v44 = vld [vmem:[%s0 + $0x60] sm:$0xff]
  %v45 = vld [vmem:[%s0 + $0x68] sm:$0xff]
  %v46 = vld [vmem:[%s0 + $0x70] sm:$0xff]
  %v47 = vld [vmem:[%s0 + $0x78] sm:$0xff]
  %v48 = vld [vmem:[%s0 + $0x80] sm:$0xff]
  %v49 = vld [vmem:[%s0 + $0x88] sm:$0xff]
  %v50 = vld [vmem:[%s0 + $0x90] sm:$0xff]
  %v51 = vld [vmem:[%s0 + $0x98] sm:$0xff]
  %v52 = vld [vmem:[%s0 + $0xa0] sm:$0xff]
  %v53 = vld [vmem:[%s0 + $0xa8] sm:$0xff]
  %v54 = vld [vmem:[%s0 + $0xb0] sm:$0xff]
  %v55 = vld [vmem:[%s0 + $0xb8] sm:$0xff]
  %v56 = vld [vmem:[%s0 + $0xc0] sm:$0xff]
  %v57 = vld [vmem:[%s0 + $0xc8] sm:$0xff]
  %v58 = vld [vmem:[%s1] sm:$0xf]
  %60 = vset.pattern.permute.xlu0 0
  %61 = vperm.xlu0 %60, %v32
  %v62 = vpop.permute.xlu0 %61
  %65 = vset.pattern.permute.xlu0 0
  %66 = vperm.xlu0 %65, %v33
  %v67 = vpop.permute.xlu0 %66
  %70 = vset.pattern.permute.xlu0 0
  %71 = vperm.xlu0 %70, %v34
  %v72 = vpop.permute.xlu0 %71
  %75 = vset.pattern.permute.xlu0 0
  %76 = vperm.xlu0 %75, %v35
  %v77 = vpop.permute.xlu0 %76
  %80 = vset.pattern.permute.xlu0 0
  %81 = vperm.xlu0 %80, %v36
  %v82 = vpop.permute.xlu0 %81
  %85 = vset.pattern.permute.xlu0 0
  %86 = vperm.xlu0 %85, %v37
  %v87 = vpop.permute.xlu0 %86
  %90 = vset.pattern.permute.xlu0 0
  %91 = vperm.xlu0 %90, %v38
  %v92 = vpop.permute.xlu0 %91
  %95 = vset.pattern.permute.xlu0 0
  %96 = vperm.xlu0 %95, %v39
  %v97 = vpop.permute.xlu0 %96
  %100 = vset.pattern.permute.xlu0 0
  %101 = vperm.xlu0 %100, %v40
  %v102 = vpop.permute.xlu0 %101
  %105 = vset.pattern.permute.xlu0 0
  %106 = vperm.xlu0 %105, %v41
  %v107 = vpop.permute.xlu0 %106
  %110 = vset.pattern.permute.xlu0 0
  %111 = vperm.xlu0 %110, %v42
  %v112 = vpop.permute.xlu0 %111
  %115 = vset.pattern.permute.xlu0 0
  %116 = vperm.xlu0 %115, %v43
  %v117 = vpop.permute.xlu0 %116
  %120 = vset.pattern.permute.xlu0 0
  %121 = vperm.xlu0 %120, %v44
  %v122 = vpop.permute.xlu0 %121
  %125 = vset.pattern.permute.xlu0 0
  %126 = vperm.xlu0 %125, %v45
  %v127 = vpop.permute.xlu0 %126
  %130 = vset.pattern.permute.xlu0 0
  %131 = vperm.xlu0 %130, %v46
  %v132 = vpop.permute.xlu0 %131
  %135 = vset.pattern.permute.xlu0 0
  %136 = vperm.xlu0 %135, %v47
  %v137 = vpop.permute.xlu0 %136
  %140 = vset.pattern.permute.xlu0 0
  %141 = vperm.xlu0 %140, %v48
  %v142 = vpop.permute.xlu0 %141
  %145 = vset.pattern.permute.xlu0 0
  %146 = vperm.xlu0 %145, %v49
  %v147 = vpop.permute.xlu0 %146
  %150 = vset.pattern.permute.xlu0 0
  %151 = vperm.xlu0 %150, %v50
  %v152 = vpop.permute.xlu0 %151
  %155 = vset.pattern.permute.xlu0 0
  %156 = vperm.xlu0 %155, %v51
  %v157 = vpop.permute.xlu0 %156
  %160 = vset.pattern.permute.xlu0 0
  %161 = vperm.xlu0 %160, %v52
  %v162 = vpop.permute.xlu0 %161
  %165 = vset.pattern.permute.xlu0 0
  %166 = vperm.xlu0 %165, %v53
  %v167 = vpop.permute.xlu0 %166
  %170 = vset.pattern.permute.xlu0 0
  %171 = vperm.xlu0 %170, %v54
  %v172 = vpop.permute.xlu0 %171
  %175 = vset.pattern.permute.xlu0 0
  %176 = vperm.xlu0 %175, %v55
  %v177 = vpop.permute.xlu0 %176
  %180 = vset.pattern.permute.xlu0 0
  %181 = vperm.xlu0 %180, %v56
  %v182 = vpop.permute.xlu0 %181
  %185 = vset.pattern.permute.xlu0 0
  %186 = vperm.xlu0 %185, %v57
  %v187 = vpop.permute.xlu0 %186
  %v190 = vlaneseq
  %v191 = vshrl.u32 %v190, 7
  %v192 = vsub.s32 0, %v191
  %v193 = vrot.slane %v58, %v192
  %v194 = vlaneseq
  %v195 = vshrl.u32 %v194, 7
  %v196 = vsub.s32 2, %v195
  %v197 = vrot.slane %v58, %v196
  %v200 = vlaneseq
  %v201 = vshrl.u32 %v200, 7
  %v202 = vsub.s32 0, %v201
  %v203 = vrot.slane %v193, %v202
  %v204 = vlaneseq
  %v205 = vshrl.u32 %v204, 7
  %v206 = vsub.s32 0, %v205
  %v207 = vrot.slane %v197, %v206
  %v208 = vmul.f32 %v62, %v203
  %v209 = vmul.f32 %v62, %v207
  %v210 = vmul.f32 %v67, %v203
  %v211 = vmul.f32 %v67, %v207
  %v212 = vmul.f32 %v72, %v203
  %v213 = vmul.f32 %v72, %v207
  %v214 = vmul.f32 %v77, %v203
  %v215 = vmul.f32 %v77, %v207
  %v216 = vmul.f32 %v82, %v203
  %v217 = vmul.f32 %v82, %v207
  %v218 = vmul.f32 %v87, %v203
  %v219 = vmul.f32 %v87, %v207
  %v220 = vmul.f32 %v92, %v203
  %v221 = vmul.f32 %v92, %v207
  %v222 = vmul.f32 %v97, %v203
  %v223 = vmul.f32 %v97, %v207
  %v224 = vmul.f32 %v102, %v203
  %v225 = vmul.f32 %v102, %v207
  %v226 = vmul.f32 %v107, %v203
  %v227 = vmul.f32 %v107, %v207
  %v228 = vmul.f32 %v112, %v203
  %v229 = vmul.f32 %v112, %v207
  %v230 = vmul.f32 %v117, %v203
  %v231 = vmul.f32 %v117, %v207
  %v232 = vmul.f32 %v122, %v203
  %v233 = vmul.f32 %v122, %v207
  %v234 = vmul.f32 %v127, %v203
  %v235 = vmul.f32 %v127, %v207
  %v236 = vmul.f32 %v132, %v203
  %v237 = vmul.f32 %v132, %v207
  %v238 = vmul.f32 %v137, %v203
  %v239 = vmul.f32 %v137, %v207
  %v240 = vmul.f32 %v142, %v203
  %v241 = vmul.f32 %v142, %v207
  %v242 = vmul.f32 %v147, %v203
  %v243 = vmul.f32 %v147, %v207
  %v244 = vmul.f32 %v152, %v203
  %v245 = vmul.f32 %v152, %v207
  %v246 = vmul.f32 %v157, %v203
  %v247 = vmul.f32 %v157, %v207
  %v248 = vmul.f32 %v162, %v203
  %v249 = vmul.f32 %v162, %v207
  %v250 = vmul.f32 %v167, %v203
  %v251 = vmul.f32 %v167, %v207
  %v252 = vmul.f32 %v172, %v203
  %v253 = vmul.f32 %v172, %v207
  %v254 = vmul.f32 %v177, %v203
  %v255 = vmul.f32 %v177, %v207
  %v256 = vmul.f32 %v182, %v203
  %v257 = vmul.f32 %v182, %v207
  %v258 = vmul.f32 %v187, %v203
  %v259 = vmul.f32 %v187, %v207
  %260 = vset.pattern.permute.xlu0 1
  %261 = vperm.xlu0 %260, %v32
  %v262 = vpop.permute.xlu0 %261
  %264 = vset.pattern.permute.xlu0 1
  %265 = vperm.xlu0 %264, %v33
  %v266 = vpop.permute.xlu0 %265
  %268 = vset.pattern.permute.xlu0 1
  %269 = vperm.xlu0 %268, %v34
  %v270 = vpop.permute.xlu0 %269
  %272 = vset.pattern.permute.xlu0 1
  %273 = vperm.xlu0 %272, %v35
  %v274 = vpop.permute.xlu0 %273
  %276 = vset.pattern.permute.xlu0 1
  %277 = vperm.xlu0 %276, %v36
  %v278 = vpop.permute.xlu0 %277
  %280 = vset.pattern.permute.xlu0 1
  %281 = vperm.xlu0 %280, %v37
  %v282 = vpop.permute.xlu0 %281
  %284 = vset.pattern.permute.xlu0 1
  %285 = vperm.xlu0 %284, %v38
  %v286 = vpop.permute.xlu0 %285
  %288 = vset.pattern.permute.xlu0 1
  %289 = vperm.xlu0 %288, %v39
  %v290 = vpop.permute.xlu0 %289
  %292 = vset.pattern.permute.xlu0 1
  %293 = vperm.xlu0 %292, %v40
  %v294 = vpop.permute.xlu0 %293
  %296 = vset.pattern.permute.xlu0 1
  %297 = vperm.xlu0 %296, %v41
  %v298 = vpop.permute.xlu0 %297
  %300 = vset.pattern.permute.xlu0 1
  %301 = vperm.xlu0 %300, %v42
  %v302 = vpop.permute.xlu0 %301
  %304 = vset.pattern.permute.xlu0 1
  %305 = vperm.xlu0 %304, %v43
  %v306 = vpop.permute.xlu0 %305
  %308 = vset.pattern.permute.xlu0 1
  %309 = vperm.xlu0 %308, %v44
  %v310 = vpop.permute.xlu0 %309
  %312 = vset.pattern.permute.xlu0 1
  %313 = vperm.xlu0 %312, %v45
  %v314 = vpop.permute.xlu0 %313
  %316 = vset.pattern.permute.xlu0 1
  %317 = vperm.xlu0 %316, %v46
  %v318 = vpop.permute.xlu0 %317
  %320 = vset.pattern.permute.xlu0 1
  %321 = vperm.xlu0 %320, %v47
  %v322 = vpop.permute.xlu0 %321
  %324 = vset.pattern.permute.xlu0 1
  %325 = vperm.xlu0 %324, %v48
  %v326 = vpop.permute.xlu0 %325
  %328 = vset.pattern.permute.xlu0 1
  %329 = vperm.xlu0 %328, %v49
  %v330 = vpop.permute.xlu0 %329
  %332 = vset.pattern.permute.xlu0 1
  %333 = vperm.xlu0 %332, %v50
  %v334 = vpop.permute.xlu0 %333
  %336 = vset.pattern.permute.xlu0 1
  %337 = vperm.xlu0 %336, %v51
  %v338 = vpop.permute.xlu0 %337
  %340 = vset.pattern.permute.xlu0 1
  %341 = vperm.xlu0 %340, %v52
  %v342 = vpop.permute.xlu0 %341
  %344 = vset.pattern.permute.xlu0 1
  %345 = vperm.xlu0 %344, %v53
  %v346 = vpop.permute.xlu0 %345
  %348 = vset.pattern.permute.xlu0 1
  %349 = vperm.xlu0 %348, %v54
  %v350 = vpop.permute.xlu0 %349
  %352 = vset.pattern.permute.xlu0 1
  %353 = vperm.xlu0 %352, %v55
  %v354 = vpop.permute.xlu0 %353
  %356 = vset.pattern.permute.xlu0 1
  %357 = vperm.xlu0 %356, %v56
  %v358 = vpop.permute.xlu0 %357
  %360 = vset.pattern.permute.xlu0 1
  %361 = vperm.xlu0 %360, %v57
  %v362 = vpop.permute.xlu0 %361
  %v364 = vlaneseq
  %v365 = vshrl.u32 %v364, 7
  %v366 = vsub.s32 1, %v365
  %v367 = vrot.slane %v58, %v366
  %v368 = vlaneseq
  %v369 = vshrl.u32 %v368, 7
  %v370 = vsub.s32 3, %v369
  %v371 = vrot.slane %v58, %v370
  %v374 = vlaneseq
  %v375 = vshrl.u32 %v374, 7
  %v376 = vsub.s32 1, %v375
  %v377 = vrot.slane %v367, %v376
  %v378 = vlaneseq
  %v379 = vshrl.u32 %v378, 7
  %v380 = vsub.s32 1, %v379
  %v381 = vrot.slane %v371, %v380
  %v382 = vmul.f32 %v262, %v377
  %v383 = vmul.f32 %v262, %v381
  %v384 = vmul.f32 %v266, %v377
  %v385 = vmul.f32 %v266, %v381
  %v386 = vmul.f32 %v270, %v377
  %v387 = vmul.f32 %v270, %v381
  %v388 = vmul.f32 %v274, %v377
  %v389 = vmul.f32 %v274, %v381
  %v390 = vmul.f32 %v278, %v377
  %v391 = vmul.f32 %v278, %v381
  %v392 = vmul.f32 %v282, %v377
  %v393 = vmul.f32 %v282, %v381
  %v394 = vmul.f32 %v286, %v377
  %v395 = vmul.f32 %v286, %v381
  %v396 = vmul.f32 %v290, %v377
  %v397 = vmul.f32 %v290, %v381
  %v398 = vmul.f32 %v294, %v377
  %v399 = vmul.f32 %v294, %v381
  %v400 = vmul.f32 %v298, %v377
  %v401 = vmul.f32 %v298, %v381
  %v402 = vmul.f32 %v302, %v377
  %v403 = vmul.f32 %v302, %v381
  %v404 = vmul.f32 %v306, %v377
  %v405 = vmul.f32 %v306, %v381
  %v406 = vmul.f32 %v310, %v377
  %v407 = vmul.f32 %v310, %v381
  %v408 = vmul.f32 %v314, %v377
  %v409 = vmul.f32 %v314, %v381
  %v410 = vmul.f32 %v318, %v377
  %v411 = vmul.f32 %v318, %v381
  %v412 = vmul.f32 %v322, %v377
  %v413 = vmul.f32 %v322, %v381
  %v414 = vmul.f32 %v326, %v377
  %v415 = vmul.f32 %v326, %v381
  %v416 = vmul.f32 %v330, %v377
  %v417 = vmul.f32 %v330, %v381
  %v418 = vmul.f32 %v334, %v377
  %v419 = vmul.f32 %v334, %v381
  %v420 = vmul.f32 %v338, %v377
  %v421 = vmul.f32 %v338, %v381
  %v422 = vmul.f32 %v342, %v377
  %v423 = vmul.f32 %v342, %v381
  %v424 = vmul.f32 %v346, %v377
  %v425 = vmul.f32 %v346, %v381
  %v426 = vmul.f32 %v350, %v377
  %v427 = vmul.f32 %v350, %v381
  %v428 = vmul.f32 %v354, %v377
  %v429 = vmul.f32 %v354, %v381
  %v430 = vmul.f32 %v358, %v377
  %v431 = vmul.f32 %v358, %v381
  %v432 = vmul.f32 %v362, %v377
  %v433 = vmul.f32 %v362, %v381
  %v434 = vadd.f32 %v208, %v382
  %v435 = vadd.f32 %v209, %v383
  %v436 = vadd.f32 %v210, %v384
  %v437 = vadd.f32 %v211, %v385
  %v438 = vadd.f32 %v212, %v386
  %v439 = vadd.f32 %v213, %v387
  %v440 = vadd.f32 %v214, %v388
  %v441 = vadd.f32 %v215, %v389
  %v442 = vadd.f32 %v216, %v390
  %v443 = vadd.f32 %v217, %v391
  %v444 = vadd.f32 %v218, %v392
  %v445 = vadd.f32 %v219, %v393
  %v446 = vadd.f32 %v220, %v394
  %v447 = vadd.f32 %v221, %v395
  %v448 = vadd.f32 %v222, %v396
  %v449 = vadd.f32 %v223, %v397
  %v450 = vadd.f32 %v224, %v398
  %v451 = vadd.f32 %v225, %v399
  %v452 = vadd.f32 %v226, %v400
  %v453 = vadd.f32 %v227, %v401
  %v454 = vadd.f32 %v228, %v402
  %v455 = vadd.f32 %v229, %v403
  %v456 = vadd.f32 %v230, %v404
  %v457 = vadd.f32 %v231, %v405
  %v458 = vadd.f32 %v232, %v406
  %v459 = vadd.f32 %v233, %v407
  %v460 = vadd.f32 %v234, %v408
  %v461 = vadd.f32 %v235, %v409
  %v462 = vadd.f32 %v236, %v410
  %v463 = vadd.f32 %v237, %v411
  %v464 = vadd.f32 %v238, %v412
  %v465 = vadd.f32 %v239, %v413
  %v466 = vadd.f32 %v240, %v414
  %v467 = vadd.f32 %v241, %v415
  %v468 = vadd.f32 %v242, %v416
  %v469 = vadd.f32 %v243, %v417
  %v470 = vadd.f32 %v244, %v418
  %v471 = vadd.f32 %v245, %v419
  %v472 = vadd.f32 %v246, %v420
  %v473 = vadd.f32 %v247, %v421
  %v474 = vadd.f32 %v248, %v422
  %v475 = vadd.f32 %v249, %v423
  %v476 = vadd.f32 %v250, %v424
  %v477 = vadd.f32 %v251, %v425
  %v478 = vadd.f32 %v252, %v426
  %v479 = vadd.f32 %v253, %v427
  %v480 = vadd.f32 %v254, %v428
  %v481 = vadd.f32 %v255, %v429
  %v482 = vadd.f32 %v256, %v430
  %v483 = vadd.f32 %v257, %v431
  %v484 = vadd.f32 %v258, %v432
  %v485 = vadd.f32 %v259, %v433
  %v486 = vld [vmem:[%s2] sm:$0x3]
  %v488 = vlaneseq
  %v489 = vshrl.u32 %v488, 7
  %v490 = vsub.s32 0, %v489
  %v491 = vrot.slane %v486, %v490
  %v492 = vlaneseq
  %v493 = vshrl.u32 %v492, 7
  %v494 = vsub.s32 1, %v493
  %v495 = vrot.slane %v486, %v494
  %v498 = vadd.f32 %v434, %v491
  %v499 = vadd.f32 %v435, %v495
  %v500 = vadd.f32 %v436, %v491
  %v501 = vadd.f32 %v437, %v495
  %v502 = vadd.f32 %v438, %v491
  %v503 = vadd.f32 %v439, %v495
  %v504 = vadd.f32 %v440, %v491
  %v505 = vadd.f32 %v441, %v495
  %v506 = vadd.f32 %v442, %v491
  %v507 = vadd.f32 %v443, %v495
  %v508 = vadd.f32 %v444, %v491
  %v509 = vadd.f32 %v445, %v495
  %v510 = vadd.f32 %v446, %v491
  %v511 = vadd.f32 %v447, %v495
  %v512 = vadd.f32 %v448, %v491
  %v513 = vadd.f32 %v449, %v495
  %v514 = vadd.f32 %v450, %v491
  %v515 = vadd.f32 %v451, %v495
  %v516 = vadd.f32 %v452, %v491
  %v517 = vadd.f32 %v453, %v495
  %v518 = vadd.f32 %v454, %v491
  %v519 = vadd.f32 %v455, %v495
  %v520 = vadd.f32 %v456, %v491
  %v521 = vadd.f32 %v457, %v495
  %v522 = vadd.f32 %v458, %v491
  %v523 = vadd.f32 %v459, %v495
  %v524 = vadd.f32 %v460, %v491
  %v525 = vadd.f32 %v461, %v495
  %v526 = vadd.f32 %v462, %v491
  %v527 = vadd.f32 %v463, %v495
  %v528 = vadd.f32 %v464, %v491
  %v529 = vadd.f32 %v465, %v495
  %v530 = vadd.f32 %v466, %v491
  %v531 = vadd.f32 %v467, %v495
  %v532 = vadd.f32 %v468, %v491
  %v533 = vadd.f32 %v469, %v495
  %v534 = vadd.f32 %v470, %v491
  %v535 = vadd.f32 %v471, %v495
  %v536 = vadd.f32 %v472, %v491
  %v537 = vadd.f32 %v473, %v495
  %v538 = vadd.f32 %v474, %v491
  %v539 = vadd.f32 %v475, %v495
  %v540 = vadd.f32 %v476, %v491
  %v541 = vadd.f32 %v477, %v495
  %v542 = vadd.f32 %v478, %v491
  %v543 = vadd.f32 %v479, %v495
  %v544 = vadd.f32 %v480, %v491
  %v545 = vadd.f32 %v481, %v495
  %v546 = vadd.f32 %v482, %v491
  %v547 = vadd.f32 %v483, %v495
  %v548 = vadd.f32 %v484, %v491
  %v549 = vadd.f32 %v485, %v495
  %v550 = vmax.f32 %v498, 0.0
  %v551 = vmax.f32 %v499, 0.0
  %v552 = vmax.f32 %v500, 0.0
  %v553 = vmax.f32 %v501, 0.0
  %v554 = vmax.f32 %v502, 0.0
  %v555 = vmax.f32 %v503, 0.0
  %v556 = vmax.f32 %v504, 0.0
  %v557 = vmax.f32 %v505, 0.0
  %v558 = vmax.f32 %v506, 0.0
  %v559 = vmax.f32 %v507, 0.0
  %v560 = vmax.f32 %v508, 0.0
  %v561 = vmax.f32 %v509, 0.0
  %v562 = vmax.f32 %v510, 0.0
  %v563 = vmax.f32 %v511, 0.0
  %v564 = vmax.f32 %v512, 0.0
  %v565 = vmax.f32 %v513, 0.0
  %v566 = vmax.f32 %v514, 0.0
  %v567 = vmax.f32 %v515, 0.0
  %v568 = vmax.f32 %v516, 0.0
  %v569 = vmax.f32 %v517, 0.0
  %v570 = vmax.f32 %v518, 0.0
  %v571 = vmax.f32 %v519, 0.0
  %v572 = vmax.f32 %v520, 0.0
  %v573 = vmax.f32 %v521, 0.0
  %v574 = vmax.f32 %v522, 0.0
  %v575 = vmax.f32 %v523, 0.0
  %v576 = vmax.f32 %v524, 0.0
  %v577 = vmax.f32 %v525, 0.0
  %v578 = vmax.f32 %v526, 0.0
  %v579 = vmax.f32 %v527, 0.0
  %v580 = vmax.f32 %v528, 0.0
  %v581 = vmax.f32 %v529, 0.0
  %v582 = vmax.f32 %v530, 0.0
  %v583 = vmax.f32 %v531, 0.0
  %v584 = vmax.f32 %v532, 0.0
  %v585 = vmax.f32 %v533, 0.0
  %v586 = vmax.f32 %v534, 0.0
  %v587 = vmax.f32 %v535, 0.0
  %v588 = vmax.f32 %v536, 0.0
  %v589 = vmax.f32 %v537, 0.0
  %v590 = vmax.f32 %v538, 0.0
  %v591 = vmax.f32 %v539, 0.0
  %v592 = vmax.f32 %v540, 0.0
  %v593 = vmax.f32 %v541, 0.0
  %v594 = vmax.f32 %v542, 0.0
  %v595 = vmax.f32 %v543, 0.0
  %v596 = vmax.f32 %v544, 0.0
  %v597 = vmax.f32 %v545, 0.0
  %v598 = vmax.f32 %v546, 0.0
  %v599 = vmax.f32 %v547, 0.0
  %v600 = vmax.f32 %v548, 0.0
  %v601 = vmax.f32 %v549, 0.0
  %v602 = vld [vmem:[%s3] sm:$0xff]
  %v603 = vld [vmem:[%s3 + $0x8] sm:$0xff]
  %v604 = vld [vmem:[%s3 + $0x10] sm:$0xff]
  %v605 = vld [vmem:[%s3 + $0x18] sm:$0xff]
  %v606 = vld [vmem:[%s3 + $0x20] sm:$0xff]
  %v607 = vld [vmem:[%s3 + $0x28] sm:$0xff]
  %v608 = vld [vmem:[%s3 + $0x30] sm:$0xff]
  %v609 = vld [vmem:[%s3 + $0x38] sm:$0xff]
  %v610 = vld [vmem:[%s3 + $0x40] sm:$0xff]
  %v611 = vld [vmem:[%s3 + $0x48] sm:$0xff]
  %v612 = vld [vmem:[%s3 + $0x50] sm:$0xff]
  %v613 = vld [vmem:[%s3 + $0x58] sm:$0xff]
  %v614 = vld [vmem:[%s3 + $0x60] sm:$0xff]
  %v615 = vld [vmem:[%s3 + $0x68] sm:$0xff]
  %v616 = vld [vmem:[%s3 + $0x70] sm:$0xff]
  %v617 = vld [vmem:[%s3 + $0x78] sm:$0xff]
  %v618 = vld [vmem:[%s3 + $0x80] sm:$0xff]
  %v619 = vld [vmem:[%s3 + $0x88] sm:$0xff]
  %v620 = vld [vmem:[%s3 + $0x90] sm:$0xff]
  %v621 = vld [vmem:[%s3 + $0x98] sm:$0xff]
  %v622 = vld [vmem:[%s3 + $0xa0] sm:$0xff]
  %v623 = vld [vmem:[%s3 + $0xa8] sm:$0xff]
  %v624 = vld [vmem:[%s3 + $0xb0] sm:$0xff]
  %v625 = vld [vmem:[%s3 + $0xb8] sm:$0xff]
  %v626 = vld [vmem:[%s3 + $0xc0] sm:$0xff]
  %v627 = vld [vmem:[%s3 + $0xc8] sm:$0xff]
  %v628 = vld [vmem:[%s3 + $0xd0] sm:$0xff]
  %v629 = vld [vmem:[%s3 + $0xd8] sm:$0xff]
  %v630 = vld [vmem:[%s3 + $0xe0] sm:$0xff]
  %v631 = vld [vmem:[%s3 + $0xe8] sm:$0xff]
  %v632 = vld [vmem:[%s3 + $0xf0] sm:$0xff]
  %v633 = vld [vmem:[%s3 + $0xf8] sm:$0xff]
  %v634 = vld [vmem:[%s4] sm:$0x1]
  %v636 = vlaneseq
  %v637 = vshrl.u32 %v636, 7
  %v638 = vsub.s32 0, %v637
  %v639 = vrot.slane %v634, %v638
  %641 = vmatprep.subr.mxu0 0.0
  %642 = vmatpush1.msra.mxu0 %v602
  %643 = vmatprep.subr.mxu0 0.0
  %644 = vmatpush1.msra.mxu0 %v603
  %645 = vmatprep.subr.mxu0 0.0
  %646 = vmatpush1.msra.mxu0 %v604
  %647 = vmatprep.subr.mxu0 0.0
  %648 = vmatpush1.msra.mxu0 %v605
  %649 = vmatprep.subr.mxu0 0.0
  %650 = vmatpush1.msra.mxu0 %v606
  %651 = vmatprep.subr.mxu0 0.0
  %652 = vmatpush1.msra.mxu0 %v607
  %653 = vmatprep.subr.mxu0 0.0
  %654 = vmatpush1.msra.mxu0 %v608
  %655 = vmatprep.subr.mxu0 0.0
  %656 = vmatpush1.msra.mxu0 %v609
  %657 = vmatprep.subr.mxu0 0.0
  %658 = vmatpush1.msra.mxu0 %v610
  %659 = vmatprep.subr.mxu0 0.0
  %660 = vmatpush1.msra.mxu0 %v611
  %661 = vmatprep.subr.mxu0 0.0
  %662 = vmatpush1.msra.mxu0 %v612
  %663 = vmatprep.subr.mxu0 0.0
  %664 = vmatpush1.msra.mxu0 %v613
  %665 = vmatprep.subr.mxu0 0.0
  %666 = vmatpush1.msra.mxu0 %v614
  %667 = vmatprep.subr.mxu0 0.0
  %668 = vmatpush1.msra.mxu0 %v615
  %669 = vmatprep.subr.mxu0 0.0
  %670 = vmatpush1.msra.mxu0 %v616
  %671 = vmatprep.subr.mxu0 0.0
  %672 = vmatpush1.msra.mxu0 %v617
  %673 = vmatprep.subr.mxu0 0.0
  %674 = vmatpush1.msra.mxu0 %v618
  %675 = vmatprep.subr.mxu0 0.0
  %676 = vmatpush1.msra.mxu0 %v619
  %677 = vmatprep.subr.mxu0 0.0
  %678 = vmatpush1.msra.mxu0 %v620
  %679 = vmatprep.subr.mxu0 0.0
  %680 = vmatpush1.msra.mxu0 %v621
  %681 = vmatprep.subr.mxu0 0.0
  %682 = vmatpush1.msra.mxu0 %v622
  %683 = vmatprep.subr.mxu0 0.0
  %684 = vmatpush1.msra.mxu0 %v623
  %685 = vmatprep.subr.mxu0 0.0
  %686 = vmatpush1.msra.mxu0 %v624
  %687 = vmatprep.subr.mxu0 0.0
  %688 = vmatpush1.msra.mxu0 %v625
  %689 = vmatprep.subr.mxu0 0.0
  %690 = vmatpush1.msra.mxu0 %v626
  %691 = vmatprep.subr.mxu0 0.0
  %692 = vmatpush1.msra.mxu0 %v627
  %693 = vmatprep.subr.mxu0 0.0
  %694 = vmatpush1.msra.mxu0 %v628
  %695 = vmatprep.subr.mxu0 0.0
  %696 = vmatpush1.msra.mxu0 %v629
  %697 = vmatprep.subr.mxu0 0.0
  %698 = vmatpush1.msra.mxu0 %v630
  %699 = vmatprep.subr.mxu0 0.0
  %700 = vmatpush1.msra.mxu0 %v631
  %701 = vmatprep.subr.mxu0 0.0
  %702 = vmatpush1.msra.mxu0 %v632
  %703 = vmatprep.subr.mxu0 0.0
  %704 = vmatpush1.msra.mxu0 %v633
  %705 = vmatprep.mubr.f32.mxu0 %v551
  %706 = vmatmul.mubr.f32.gmra.mrb[0].mxu0 %v550
  %v707 = vpop.f32.mrb[0].mxu0
  %v708 = vadd.f32 %v639, %v707
  %v709 = vpop.f32.mrb[0].mxu0
  %710 = vmatprep.mubr.f32.mxu0 %v553
  %711 = vmatmul.mubr.f32.gmra.mrb[0].mxu0 %v552
  %v712 = vpop.f32.mrb[0].mxu0
  %v713 = vadd.f32 %v639, %v712
  %v714 = vpop.f32.mrb[0].mxu0
  %715 = vmatprep.mubr.f32.mxu0 %v555
  %716 = vmatmul.mubr.f32.gmra.mrb[0].mxu0 %v554
  %v717 = vpop.f32.mrb[0].mxu0
  %v718 = vadd.f32 %v639, %v717
  %v719 = vpop.f32.mrb[0].mxu0
  %720 = vmatprep.mubr.f32.mxu0 %v557
  %721 = vmatmul.mubr.f32.gmra.mrb[0].mxu0 %v556
  %v722 = vpop.f32.mrb[0].mxu0
  %v723 = vadd.f32 %v639, %v722
  %v724 = vpop.f32.mrb[0].mxu0
  %725 = vmatprep.mubr.f32.mxu0 %v559
  %726 = vmatmul.mubr.f32.gmra.mrb[0].mxu0 %v558
  %v727 = vpop.f32.mrb[0].mxu0
  %v728 = vadd.f32 %v639, %v727
  %v729 = vpop.f32.mrb[0].mxu0
  %730 = vmatprep.mubr.f32.mxu0 %v561
  %731 = vmatmul.mubr.f32.gmra.mrb[0].mxu0 %v560
  %v732 = vpop.f32.mrb[0].mxu0
  %v733 = vadd.f32 %v639, %v732
  %v734 = vpop.f32.mrb[0].mxu0
  %735 = vmatprep.mubr.f32.mxu0 %v563
  %736 = vmatmul.mubr.f32.gmra.mrb[0].mxu0 %v562
  %v737 = vpop.f32.mrb[0].mxu0
  %v738 = vadd.f32 %v639, %v737
  %v739 = vpop.f32.mrb[0].mxu0
  %740 = vmatprep.mubr.f32.mxu0 %v565
  %741 = vmatmul.mubr.f32.gmra.mrb[0].mxu0 %v564
  %v742 = vpop.f32.mrb[0].mxu0
  %v743 = vadd.f32 %v639, %v742
  %v744 = vpop.f32.mrb[0].mxu0
  %745 = vmatprep.mubr.f32.mxu0 %v567
  %746 = vmatmul.mubr.f32.gmra.mrb[0].mxu0 %v566
  %v747 = vpop.f32.mrb[0].mxu0
  %v748 = vadd.f32 %v639, %v747
  %v749 = vpop.f32.mrb[0].mxu0
  %750 = vmatprep.mubr.f32.mxu0 %v569
  %751 = vmatmul.mubr.f32.gmra.mrb[0].mxu0 %v568
  %v752 = vpop.f32.mrb[0].mxu0
  %v753 = vadd.f32 %v639, %v752
  %v754 = vpop.f32.mrb[0].mxu0
  %755 = vmatprep.mubr.f32.mxu0 %v571
  %756 = vmatmul.mubr.f32.gmra.mrb[0].mxu0 %v570
  %v757 = vpop.f32.mrb[0].mxu0
  %v758 = vadd.f32 %v639, %v757
  %v759 = vpop.f32.mrb[0].mxu0
  %760 = vmatprep.mubr.f32.mxu0 %v573
  %761 = vmatmul.mubr.f32.gmra.mrb[0].mxu0 %v572
  %v762 = vpop.f32.mrb[0].mxu0
  %v763 = vadd.f32 %v639, %v762
  %v764 = vpop.f32.mrb[0].mxu0
  %765 = vmatprep.mubr.f32.mxu0 %v575
  %766 = vmatmul.mubr.f32.gmra.mrb[0].mxu0 %v574
  %v767 = vpop.f32.mrb[0].mxu0
  %v768 = vadd.f32 %v639, %v767
  %v769 = vpop.f32.mrb[0].mxu0
  %770 = vmatprep.mubr.f32.mxu0 %v577
  %771 = vmatmul.mubr.f32.gmra.mrb[0].mxu0 %v576
  %v772 = vpop.f32.mrb[0].mxu0
  %v773 = vadd.f32 %v639, %v772
  %v774 = vpop.f32.mrb[0].mxu0
  %775 = vmatprep.mubr.f32.mxu0 %v579
  %776 = vmatmul.mubr.f32.gmra.mrb[0].mxu0 %v578
  %v777 = vpop.f32.mrb[0].mxu0
  %v778 = vadd.f32 %v639, %v777
  %v779 = vpop.f32.mrb[0].mxu0
  %780 = vmatprep.mubr.f32.mxu0 %v581
  %781 = vmatmul.mubr.f32.gmra.mrb[0].mxu0 %v580
  %v782 = vpop.f32.mrb[0].mxu0
  %v783 = vadd.f32 %v639, %v782
  %v784 = vpop.f32.mrb[0].mxu0
  %785 = vmatprep.mubr.f32.mxu0 %v583
  %786 = vmatmul.mubr.f32.gmra.mrb[0].mxu0 %v582
  %v787 = vpop.f32.mrb[0].mxu0
  %v788 = vadd.f32 %v639, %v787
  %v789 = vpop.f32.mrb[0].mxu0
  %790 = vmatprep.mubr.f32.mxu0 %v585
  %791 = vmatmul.mubr.f32.gmra.mrb[0].mxu0 %v584
  %v792 = vpop.f32.mrb[0].mxu0
  %v793 = vadd.f32 %v639, %v792
  %v794 = vpop.f32.mrb[0].mxu0
  %795 = vmatprep.mubr.f32.mxu0 %v587
  %796 = vmatmul.mubr.f32.gmra.mrb[0].mxu0 %v586
  %v797 = vpop.f32.mrb[0].mxu0
  %v798 = vadd.f32 %v639, %v797
  %v799 = vpop.f32.mrb[0].mxu0
  %800 = vmatprep.mubr.f32.mxu0 %v589
  %801 = vmatmul.mubr.f32.gmra.mrb[0].mxu0 %v588
  %v802 = vpop.f32.mrb[0].mxu0
  %v803 = vadd.f32 %v639, %v802
  %v804 = vpop.f32.mrb[0].mxu0
  %805 = vmatprep.mubr.f32.mxu0 %v591
  %806 = vmatmul.mubr.f32.gmra.mrb[0].mxu0 %v590
  %v807 = vpop.f32.mrb[0].mxu0
  %v808 = vadd.f32 %v639, %v807
  %v809 = vpop.f32.mrb[0].mxu0
  %810 = vmatprep.mubr.f32.mxu0 %v593
  %811 = vmatmul.mubr.f32.gmra.mrb[0].mxu0 %v592
  %v812 = vpop.f32.mrb[0].mxu0
  %v813 = vadd.f32 %v639, %v812
  %v814 = vpop.f32.mrb[0].mxu0
  %815 = vmatprep.mubr.f32.mxu0 %v595
  %816 = vmatmul.mubr.f32.gmra.mrb[0].mxu0 %v594
  %v817 = vpop.f32.mrb[0].mxu0
  %v818 = vadd.f32 %v639, %v817
  %v819 = vpop.f32.mrb[0].mxu0
  %820 = vmatprep.mubr.f32.mxu0 %v597
  %821 = vmatmul.mubr.f32.gmra.mrb[0].mxu0 %v596
  %v822 = vpop.f32.mrb[0].mxu0
  %v823 = vadd.f32 %v639, %v822
  %v824 = vpop.f32.mrb[0].mxu0
  %825 = vmatprep.mubr.f32.mxu0 %v599
  %826 = vmatmul.mubr.f32.gmra.mrb[0].mxu0 %v598
  %v827 = vpop.f32.mrb[0].mxu0
  %v828 = vadd.f32 %v639, %v827
  %v829 = vpop.f32.mrb[0].mxu0
  %830 = vmatprep.mubr.f32.mxu0 %v601
  %831 = vmatmul.mubr.f32.gmra.mrb[0].mxu0 %v600
  %v832 = vpop.f32.mrb[0].mxu0
  %v833 = vadd.f32 %v639, %v832
  %v834 = vpop.f32.mrb[0].mxu0
  %835 = vdwg.mxu0
  %v836 = vmax.f32 %v708, 0.0
  %v837 = vmax.f32 %v713, 0.0
  %v838 = vmax.f32 %v718, 0.0
  %v839 = vmax.f32 %v723, 0.0
  %v840 = vmax.f32 %v728, 0.0
  %v841 = vmax.f32 %v733, 0.0
  %v842 = vmax.f32 %v738, 0.0
  %v843 = vmax.f32 %v743, 0.0
  %v844 = vmax.f32 %v748, 0.0
  %v845 = vmax.f32 %v753, 0.0
  %v846 = vmax.f32 %v758, 0.0
  %v847 = vmax.f32 %v763, 0.0
  %v848 = vmax.f32 %v768, 0.0
  %v849 = vmax.f32 %v773, 0.0
  %v850 = vmax.f32 %v778, 0.0
  %v851 = vmax.f32 %v783, 0.0
  %v852 = vmax.f32 %v788, 0.0
  %v853 = vmax.f32 %v793, 0.0
  %v854 = vmax.f32 %v798, 0.0
  %v855 = vmax.f32 %v803, 0.0
  %v856 = vmax.f32 %v808, 0.0
  %v857 = vmax.f32 %v813, 0.0
  %v858 = vmax.f32 %v818, 0.0
  %v859 = vmax.f32 %v823, 0.0
  %v860 = vmax.f32 %v828, 0.0
  %v861 = vmax.f32 %v833, 0.0
  %v862 = vld [vmem:[%s5] sm:$0xff]
  %v863 = vld [vmem:[%s5 + $0x8] sm:$0xff]
  %v864 = vld [vmem:[%s5 + $0x10] sm:$0xff]
  %v865 = vld [vmem:[%s5 + $0x18] sm:$0xff]
  %v866 = vld [vmem:[%s5 + $0x20] sm:$0xff]
  %v867 = vld [vmem:[%s5 + $0x28] sm:$0xff]
  %v868 = vld [vmem:[%s5 + $0x30] sm:$0xff]
  %v869 = vld [vmem:[%s5 + $0x38] sm:$0xff]
  %v870 = vld [vmem:[%s5 + $0x40] sm:$0xff]
  %v871 = vld [vmem:[%s5 + $0x48] sm:$0xff]
  %v872 = vld [vmem:[%s5 + $0x50] sm:$0xff]
  %v873 = vld [vmem:[%s5 + $0x58] sm:$0xff]
  %v874 = vld [vmem:[%s5 + $0x60] sm:$0xff]
  %v875 = vld [vmem:[%s5 + $0x68] sm:$0xff]
  %v876 = vld [vmem:[%s5 + $0x70] sm:$0xff]
  %v877 = vld [vmem:[%s5 + $0x78] sm:$0xff]
  %v878 = vld [vmem:[%s5 + $0x80] sm:$0xff]
  %v879 = vld [vmem:[%s5 + $0x88] sm:$0xff]
  %v880 = vld [vmem:[%s5 + $0x90] sm:$0xff]
  %v881 = vld [vmem:[%s5 + $0x98] sm:$0xff]
  %v882 = vld [vmem:[%s5 + $0xa0] sm:$0xff]
  %v883 = vld [vmem:[%s5 + $0xa8] sm:$0xff]
  %v884 = vld [vmem:[%s5 + $0xb0] sm:$0xff]
  %v885 = vld [vmem:[%s5 + $0xb8] sm:$0xff]
  %v886 = vld [vmem:[%s6] sm:$0x7]
  %v888 = vlaneseq
  %v889 = vshrl.u32 %v888, 7
  %v890 = vsub.s32 0, %v889
  %v891 = vrot.slane %v886, %v890
  %v892 = vlaneseq
  %v893 = vshrl.u32 %v892, 7
  %v894 = vsub.s32 1, %v893
  %v895 = vrot.slane %v886, %v894
  %v896 = vlaneseq
  %v897 = vshrl.u32 %v896, 7
  %v898 = vsub.s32 2, %v897
  %v899 = vrot.slane %v886, %v898
  %vm903 = vcmask 523264
  %v905 = vsel %vm903, %v836, 0
  %v908 = vsel %vm903, %v837, 0
  %v911 = vsel %vm903, %v838, 0
  %v914 = vsel %vm903, %v839, 0
  %v917 = vsel %vm903, %v840, 0
  %v920 = vsel %vm903, %v841, 0
  %v923 = vsel %vm903, %v842, 0
  %v926 = vsel %vm903, %v843, 0
  %v929 = vsel %vm903, %v844, 0
  %v932 = vsel %vm903, %v845, 0
  %v935 = vsel %vm903, %v846, 0
  %v938 = vsel %vm903, %v847, 0
  %v941 = vsel %vm903, %v848, 0
  %v944 = vsel %vm903, %v849, 0
  %v947 = vsel %vm903, %v850, 0
  %v950 = vsel %vm903, %v851, 0
  %v953 = vsel %vm903, %v852, 0
  %v956 = vsel %vm903, %v853, 0
  %v959 = vsel %vm903, %v854, 0
  %v962 = vsel %vm903, %v855, 0
  %v965 = vsel %vm903, %v856, 0
  %v968 = vsel %vm903, %v857, 0
  %v971 = vsel %vm903, %v858, 0
  %v974 = vsel %vm903, %v859, 0
  %v977 = vsel %vm903, %v860, 0
  %v980 = vsel %vm903, %v861, 0
  %982 = vmatprep.subr.mxu0 %v863
  %983 = vmatpush1.msra.mxu0 %v862
  %984 = vmatprep.subr.mxu0 %v866
  %985 = vmatpush1.msra.mxu0 %v865
  %986 = vmatprep.subr.mxu0 %v869
  %987 = vmatpush1.msra.mxu0 %v868
  %988 = vmatprep.subr.mxu0 %v872
  %989 = vmatpush1.msra.mxu0 %v871
  %990 = vmatprep.subr.mxu0 %v875
  %991 = vmatpush1.msra.mxu0 %v874
  %992 = vmatprep.subr.mxu0 %v878
  %993 = vmatpush1.msra.mxu0 %v877
  %994 = vmatprep.subr.mxu0 %v881
  %995 = vmatpush1.msra.mxu0 %v880
  %996 = vmatprep.subr.mxu0 %v884
  %997 = vmatpush1.msra.mxu0 %v883
  %998 = vmatprep.subr.mxu0 0.0
  %999 = vmatpush1.msra.mxu0 0.0
  %1000 = vmatprep.subr.mxu0 0.0
  %1001 = vmatpush1.msra.mxu0 0.0
  %1002 = vmatprep.subr.mxu0 0.0
  %1003 = vmatpush1.msra.mxu0 0.0
  %1004 = vmatprep.subr.mxu0 0.0
  %1005 = vmatpush1.msra.mxu0 0.0
  %1006 = vmatprep.subr.mxu0 0.0
  %1007 = vmatpush1.msra.mxu0 0.0
  %1008 = vmatprep.subr.mxu0 0.0
  %1009 = vmatpush1.msra.mxu0 0.0
  %1010 = vmatprep.subr.mxu0 0.0
  %1011 = vmatpush1.msra.mxu0 0.0
  %1012 = vmatprep.subr.mxu0 0.0
  %1013 = vmatpush1.msra.mxu0 0.0
  %1014 = vmatprep.subr.mxu0 0.0
  %1015 = vmatpush1.msra.mxu0 0.0
  %1016 = vmatprep.subr.mxu0 0.0
  %1017 = vmatpush1.msra.mxu0 0.0
  %1018 = vmatprep.subr.mxu0 0.0
  %1019 = vmatpush1.msra.mxu0 0.0
  %1020 = vmatprep.subr.mxu0 0.0
  %1021 = vmatpush1.msra.mxu0 0.0
  %1022 = vmatprep.subr.mxu0 0.0
  %1023 = vmatpush1.msra.mxu0 0.0
  %1024 = vmatprep.subr.mxu0 0.0
  %1025 = vmatpush1.msra.mxu0 0.0
  %1026 = vmatprep.subr.mxu0 0.0
  %1027 = vmatpush1.msra.mxu0 0.0
  %1028 = vmatprep.subr.mxu0 0.0
  %1029 = vmatpush1.msra.mxu0 0.0
  %1030 = vmatprep.subr.mxu0 0.0
  %1031 = vmatpush1.msra.mxu0 0.0
  %1032 = vmatprep.subr.mxu0 0.0
  %1033 = vmatpush1.msra.mxu0 0.0
  %1034 = vmatprep.subr.mxu0 0.0
  %1035 = vmatpush1.msra.mxu0 0.0
  %1036 = vmatprep.subr.mxu0 0.0
  %1037 = vmatpush1.msra.mxu0 0.0
  %1038 = vmatprep.subr.mxu0 0.0
  %1039 = vmatpush1.msra.mxu0 0.0
  %1040 = vmatprep.subr.mxu0 0.0
  %1041 = vmatpush1.msra.mxu0 0.0
  %1042 = vmatprep.subr.mxu0 0.0
  %1043 = vmatpush1.msra.mxu0 0.0
  %1044 = vmatprep.subr.mxu0 0.0
  %1045 = vmatpush1.msra.mxu0 0.0
  %1046 = vmatprep.mubr.f32.mxu0 0.0
  %1047 = vmatmul.mubr.f32.gmra.mrb[0].mxu0 %v905
  %v1048 = vpop.f32.mrb[0].mxu0
  %v1049 = vadd.f32 %v891, %v1048
  %v1050 = vpop.f32.mrb[0].mxu0
  %v1051 = vadd.f32 %v895, %v1050
  %1052 = vmatprep.mubr.f32.mxu0 0.0
  %1053 = vmatmul.mubr.f32.gmra.mrb[0].mxu0 %v908
  %v1054 = vpop.f32.mrb[0].mxu0
  %v1055 = vadd.f32 %v891, %v1054
  %v1056 = vpop.f32.mrb[0].mxu0
  %v1057 = vadd.f32 %v895, %v1056
  %1058 = vmatprep.mubr.f32.mxu0 0.0
  %1059 = vmatmul.mubr.f32.gmra.mrb[0].mxu0 %v911
  %v1060 = vpop.f32.mrb[0].mxu0
  %v1061 = vadd.f32 %v891, %v1060
  %v1062 = vpop.f32.mrb[0].mxu0
  %v1063 = vadd.f32 %v895, %v1062
  %1064 = vmatprep.mubr.f32.mxu0 0.0
  %1065 = vmatmul.mubr.f32.gmra.mrb[0].mxu0 %v914
  %v1066 = vpop.f32.mrb[0].mxu0
  %v1067 = vadd.f32 %v891, %v1066
  %v1068 = vpop.f32.mrb[0].mxu0
  %v1069 = vadd.f32 %v895, %v1068
  %1070 = vmatprep.mubr.f32.mxu0 0.0
  %1071 = vmatmul.mubr.f32.gmra.mrb[0].mxu0 %v917
  %v1072 = vpop.f32.mrb[0].mxu0
  %v1073 = vadd.f32 %v891, %v1072
  %v1074 = vpop.f32.mrb[0].mxu0
  %v1075 = vadd.f32 %v895, %v1074
  %1076 = vmatprep.mubr.f32.mxu0 0.0
  %1077 = vmatmul.mubr.f32.gmra.mrb[0].mxu0 %v920
  %v1078 = vpop.f32.mrb[0].mxu0
  %v1079 = vadd.f32 %v891, %v1078
  %v1080 = vpop.f32.mrb[0].mxu0
  %v1081 = vadd.f32 %v895, %v1080
  %1082 = vmatprep.mubr.f32.mxu0 0.0
  %1083 = vmatmul.mubr.f32.gmra.mrb[0].mxu0 %v923
  %v1084 = vpop.f32.mrb[0].mxu0
  %v1085 = vadd.f32 %v891, %v1084
  %v1086 = vpop.f32.mrb[0].mxu0
  %v1087 = vadd.f32 %v895, %v1086
  %1088 = vmatprep.mubr.f32.mxu0 0.0
  %1089 = vmatmul.mubr.f32.gmra.mrb[0].mxu0 %v926
  %v1090 = vpop.f32.mrb[0].mxu0
  %v1091 = vadd.f32 %v891, %v1090
  %v1092 = vpop.f32.mrb[0].mxu0
  %v1093 = vadd.f32 %v895, %v1092
  %1094 = vmatprep.mubr.f32.mxu0 0.0
  %1095 = vmatmul.mubr.f32.gmra.mrb[0].mxu0 %v929
  %v1096 = vpop.f32.mrb[0].mxu0
  %v1097 = vadd.f32 %v891, %v1096
  %v1098 = vpop.f32.mrb[0].mxu0
  %v1099 = vadd.f32 %v895, %v1098
  %1100 = vmatprep.mubr.f32.mxu0 0.0
  %1101 = vmatmul.mubr.f32.gmra.mrb[0].mxu0 %v932
  %v1102 = vpop.f32.mrb[0].mxu0
  %v1103 = vadd.f32 %v891, %v1102
  %v1104 = vpop.f32.mrb[0].mxu0
  %v1105 = vadd.f32 %v895, %v1104
  %1106 = vmatprep.mubr.f32.mxu0 0.0
  %1107 = vmatmul.mubr.f32.gmra.mrb[0].mxu0 %v935
  %v1108 = vpop.f32.mrb[0].mxu0
  %v1109 = vadd.f32 %v891, %v1108
  %v1110 = vpop.f32.mrb[0].mxu0
  %v1111 = vadd.f32 %v895, %v1110
  %1112 = vmatprep.mubr.f32.mxu0 0.0
  %1113 = vmatmul.mubr.f32.gmra.mrb[0].mxu0 %v938
  %v1114 = vpop.f32.mrb[0].mxu0
  %v1115 = vadd.f32 %v891, %v1114
  %v1116 = vpop.f32.mrb[0].mxu0
  %v1117 = vadd.f32 %v895, %v1116
  %1118 = vmatprep.mubr.f32.mxu0 0.0
  %1119 = vmatmul.mubr.f32.gmra.mrb[0].mxu0 %v941
  %v1120 = vpop.f32.mrb[0].mxu0
  %v1121 = vadd.f32 %v891, %v1120
  %v1122 = vpop.f32.mrb[0].mxu0
  %v1123 = vadd.f32 %v895, %v1122
  %1124 = vmatprep.mubr.f32.mxu0 0.0
  %1125 = vmatmul.mubr.f32.gmra.mrb[0].mxu0 %v944
  %v1126 = vpop.f32.mrb[0].mxu0
  %v1127 = vadd.f32 %v891, %v1126
  %v1128 = vpop.f32.mrb[0].mxu0
  %v1129 = vadd.f32 %v895, %v1128
  %1130 = vmatprep.mubr.f32.mxu0 0.0
  %1131 = vmatmul.mubr.f32.gmra.mrb[0].mxu0 %v947
  %v1132 = vpop.f32.mrb[0].mxu0
  %v1133 = vadd.f32 %v891, %v1132
  %v1134 = vpop.f32.mrb[0].mxu0
  %v1135 = vadd.f32 %v895, %v1134
  %1136 = vmatprep.mubr.f32.mxu0 0.0
  %1137 = vmatmul.mubr.f32.gmra.mrb[0].mxu0 %v950
  %v1138 = vpop.f32.mrb[0].mxu0
  %v1139 = vadd.f32 %v891, %v1138
  %v1140 = vpop.f32.mrb[0].mxu0
  %v1141 = vadd.f32 %v895, %v1140
  %1142 = vmatprep.mubr.f32.mxu0 0.0
  %1143 = vmatmul.mubr.f32.gmra.mrb[0].mxu0 %v953
  %v1144 = vpop.f32.mrb[0].mxu0
  %v1145 = vadd.f32 %v891, %v1144
  %v1146 = vpop.f32.mrb[0].mxu0
  %v1147 = vadd.f32 %v895, %v1146
  %1148 = vmatprep.mubr.f32.mxu0 0.0
  %1149 = vmatmul.mubr.f32.gmra.mrb[0].mxu0 %v956
  %v1150 = vpop.f32.mrb[0].mxu0
  %v1151 = vadd.f32 %v891, %v1150
  %v1152 = vpop.f32.mrb[0].mxu0
  %v1153 = vadd.f32 %v895, %v1152
  %1154 = vmatprep.mubr.f32.mxu0 0.0
  %1155 = vmatmul.mubr.f32.gmra.mrb[0].mxu0 %v959
  %v1156 = vpop.f32.mrb[0].mxu0
  %v1157 = vadd.f32 %v891, %v1156
  %v1158 = vpop.f32.mrb[0].mxu0
  %v1159 = vadd.f32 %v895, %v1158
  %1160 = vmatprep.mubr.f32.mxu0 0.0
  %1161 = vmatmul.mubr.f32.gmra.mrb[0].mxu0 %v962
  %v1162 = vpop.f32.mrb[0].mxu0
  %v1163 = vadd.f32 %v891, %v1162
  %v1164 = vpop.f32.mrb[0].mxu0
  %v1165 = vadd.f32 %v895, %v1164
  %1166 = vmatprep.mubr.f32.mxu0 0.0
  %1167 = vmatmul.mubr.f32.gmra.mrb[0].mxu0 %v965
  %v1168 = vpop.f32.mrb[0].mxu0
  %v1169 = vadd.f32 %v891, %v1168
  %v1170 = vpop.f32.mrb[0].mxu0
  %v1171 = vadd.f32 %v895, %v1170
  %1172 = vmatprep.mubr.f32.mxu0 0.0
  %1173 = vmatmul.mubr.f32.gmra.mrb[0].mxu0 %v968
  %v1174 = vpop.f32.mrb[0].mxu0
  %v1175 = vadd.f32 %v891, %v1174
  %v1176 = vpop.f32.mrb[0].mxu0
  %v1177 = vadd.f32 %v895, %v1176
  %1178 = vmatprep.mubr.f32.mxu0 0.0
  %1179 = vmatmul.mubr.f32.gmra.mrb[0].mxu0 %v971
  %v1180 = vpop.f32.mrb[0].mxu0
  %v1181 = vadd.f32 %v891, %v1180
  %v1182 = vpop.f32.mrb[0].mxu0
  %v1183 = vadd.f32 %v895, %v1182
  %1184 = vmatprep.mubr.f32.mxu0 0.0
  %1185 = vmatmul.mubr.f32.gmra.mrb[0].mxu0 %v974
  %v1186 = vpop.f32.mrb[0].mxu0
  %v1187 = vadd.f32 %v891, %v1186
  %v1188 = vpop.f32.mrb[0].mxu0
  %v1189 = vadd.f32 %v895, %v1188
  %1190 = vmatprep.mubr.f32.mxu0 0.0
  %1191 = vmatmul.mubr.f32.gmra.mrb[0].mxu0 %v977
  %v1192 = vpop.f32.mrb[0].mxu0
  %v1193 = vadd.f32 %v891, %v1192
  %v1194 = vpop.f32.mrb[0].mxu0
  %v1195 = vadd.f32 %v895, %v1194
  %1196 = vmatprep.mubr.f32.mxu0 0.0
  %1197 = vmatmul.mubr.f32.gmra.mrb[0].mxu0 %v980
  %v1198 = vpop.f32.mrb[0].mxu0
  %v1199 = vadd.f32 %v891, %v1198
  %v1200 = vpop.f32.mrb[0].mxu0
  %v1201 = vadd.f32 %v895, %v1200
  %1202 = vdwg.mxu0
  %1203 = vmatprep.subr.mxu0 0.0
  %1204 = vmatpush1.msra.mxu0 %v864
  %1205 = vmatprep.subr.mxu0 0.0
  %1206 = vmatpush1.msra.mxu0 %v867
  %1207 = vmatprep.subr.mxu0 0.0
  %1208 = vmatpush1.msra.mxu0 %v870
  %1209 = vmatprep.subr.mxu0 0.0
  %1210 = vmatpush1.msra.mxu0 %v873
  %1211 = vmatprep.subr.mxu0 0.0
  %1212 = vmatpush1.msra.mxu0 %v876
  %1213 = vmatprep.subr.mxu0 0.0
  %1214 = vmatpush1.msra.mxu0 %v879
  %1215 = vmatprep.subr.mxu0 0.0
  %1216 = vmatpush1.msra.mxu0 %v882
  %1217 = vmatprep.subr.mxu0 0.0
  %1218 = vmatpush1.msra.mxu0 %v885
  %1219 = vmatprep.subr.mxu0 0.0
  %1220 = vmatpush1.msra.mxu0 0.0
  %1221 = vmatprep.subr.mxu0 0.0
  %1222 = vmatpush1.msra.mxu0 0.0
  %1223 = vmatprep.subr.mxu0 0.0
  %1224 = vmatpush1.msra.mxu0 0.0
  %1225 = vmatprep.subr.mxu0 0.0
  %1226 = vmatpush1.msra.mxu0 0.0
  %1227 = vmatprep.subr.mxu0 0.0
  %1228 = vmatpush1.msra.mxu0 0.0
  %1229 = vmatprep.subr.mxu0 0.0
  %1230 = vmatpush1.msra.mxu0 0.0
  %1231 = vmatprep.subr.mxu0 0.0
  %1232 = vmatpush1.msra.mxu0 0.0
  %1233 = vmatprep.subr.mxu0 0.0
  %1234 = vmatpush1.msra.mxu0 0.0
  %1235 = vmatprep.subr.mxu0 0.0
  %1236 = vmatpush1.msra.mxu0 0.0
  %1237 = vmatprep.subr.mxu0 0.0
  %1238 = vmatpush1.msra.mxu0 0.0
  %1239 = vmatprep.subr.mxu0 0.0
  %1240 = vmatpush1.msra.mxu0 0.0
  %1241 = vmatprep.subr.mxu0 0.0
  %1242 = vmatpush1.msra.mxu0 0.0
  %1243 = vmatprep.subr.mxu0 0.0
  %1244 = vmatpush1.msra.mxu0 0.0
  %1245 = vmatprep.subr.mxu0 0.0
  %1246 = vmatpush1.msra.mxu0 0.0
  %1247 = vmatprep.subr.mxu0 0.0
  %1248 = vmatpush1.msra.mxu0 0.0
  %1249 = vmatprep.subr.mxu0 0.0
  %1250 = vmatpush1.msra.mxu0 0.0
  %1251 = vmatprep.subr.mxu0 0.0
  %1252 = vmatpush1.msra.mxu0 0.0
  %1253 = vmatprep.subr.mxu0 0.0
  %1254 = vmatpush1.msra.mxu0 0.0
  %1255 = vmatprep.subr.mxu0 0.0
  %1256 = vmatpush1.msra.mxu0 0.0
  %1257 = vmatprep.subr.mxu0 0.0
  %1258 = vmatpush1.msra.mxu0 0.0
  %1259 = vmatprep.subr.mxu0 0.0
  %1260 = vmatpush1.msra.mxu0 0.0
  %1261 = vmatprep.subr.mxu0 0.0
  %1262 = vmatpush1.msra.mxu0 0.0
  %1263 = vmatprep.subr.mxu0 0.0
  %1264 = vmatpush1.msra.mxu0 0.0
  %1265 = vmatprep.subr.mxu0 0.0
  %1266 = vmatpush1.msra.mxu0 0.0
  %1267 = vmatprep.mubr.f32.mxu0 0.0
  %1268 = vmatmul.mubr.f32.gmra.mrb[0].mxu0 %v905
  %v1269 = vpop.f32.mrb[0].mxu0
  %v1270 = vadd.f32 %v899, %v1269
  %v1271 = vpop.f32.mrb[0].mxu0
  %1272 = vmatprep.mubr.f32.mxu0 0.0
  %1273 = vmatmul.mubr.f32.gmra.mrb[0].mxu0 %v908
  %v1274 = vpop.f32.mrb[0].mxu0
  %v1275 = vadd.f32 %v899, %v1274
  %v1276 = vpop.f32.mrb[0].mxu0
  %1277 = vmatprep.mubr.f32.mxu0 0.0
  %1278 = vmatmul.mubr.f32.gmra.mrb[0].mxu0 %v911
  %v1279 = vpop.f32.mrb[0].mxu0
  %v1280 = vadd.f32 %v899, %v1279
  %v1281 = vpop.f32.mrb[0].mxu0
  %1282 = vmatprep.mubr.f32.mxu0 0.0
  %1283 = vmatmul.mubr.f32.gmra.mrb[0].mxu0 %v914
  %v1284 = vpop.f32.mrb[0].mxu0
  %v1285 = vadd.f32 %v899, %v1284
  %v1286 = vpop.f32.mrb[0].mxu0
  %1287 = vmatprep.mubr.f32.mxu0 0.0
  %1288 = vmatmul.mubr.f32.gmra.mrb[0].mxu0 %v917
  %v1289 = vpop.f32.mrb[0].mxu0
  %v1290 = vadd.f32 %v899, %v1289
  %v1291 = vpop.f32.mrb[0].mxu0
  %1292 = vmatprep.mubr.f32.mxu0 0.0
  %1293 = vmatmul.mubr.f32.gmra.mrb[0].mxu0 %v920
  %v1294 = vpop.f32.mrb[0].mxu0
  %v1295 = vadd.f32 %v899, %v1294
  %v1296 = vpop.f32.mrb[0].mxu0
  %1297 = vmatprep.mubr.f32.mxu0 0.0
  %1298 = vmatmul.mubr.f32.gmra.mrb[0].mxu0 %v923
  %v1299 = vpop.f32.mrb[0].mxu0
  %v1300 = vadd.f32 %v899, %v1299
  %v1301 = vpop.f32.mrb[0].mxu0
  %1302 = vmatprep.mubr.f32.mxu0 0.0
  %1303 = vmatmul.mubr.f32.gmra.mrb[0].mxu0 %v926
  %v1304 = vpop.f32.mrb[0].mxu0
  %v1305 = vadd.f32 %v899, %v1304
  %v1306 = vpop.f32.mrb[0].mxu0
  %1307 = vmatprep.mubr.f32.mxu0 0.0
  %1308 = vmatmul.mubr.f32.gmra.mrb[0].mxu0 %v929
  %v1309 = vpop.f32.mrb[0].mxu0
  %v1310 = vadd.f32 %v899, %v1309
  %v1311 = vpop.f32.mrb[0].mxu0
  %1312 = vmatprep.mubr.f32.mxu0 0.0
  %1313 = vmatmul.mubr.f32.gmra.mrb[0].mxu0 %v932
  %v1314 = vpop.f32.mrb[0].mxu0
  %v1315 = vadd.f32 %v899, %v1314
  %v1316 = vpop.f32.mrb[0].mxu0
  %1317 = vmatprep.mubr.f32.mxu0 0.0
  %1318 = vmatmul.mubr.f32.gmra.mrb[0].mxu0 %v935
  %v1319 = vpop.f32.mrb[0].mxu0
  %v1320 = vadd.f32 %v899, %v1319
  %v1321 = vpop.f32.mrb[0].mxu0
  %1322 = vmatprep.mubr.f32.mxu0 0.0
  %1323 = vmatmul.mubr.f32.gmra.mrb[0].mxu0 %v938
  %v1324 = vpop.f32.mrb[0].mxu0
  %v1325 = vadd.f32 %v899, %v1324
  %v1326 = vpop.f32.mrb[0].mxu0
  %1327 = vmatprep.mubr.f32.mxu0 0.0
  %1328 = vmatmul.mubr.f32.gmra.mrb[0].mxu0 %v941
  %v1329 = vpop.f32.mrb[0].mxu0
  %v1330 = vadd.f32 %v899, %v1329
  %v1331 = vpop.f32.mrb[0].mxu0
  %1332 = vmatprep.mubr.f32.mxu0 0.0
  %1333 = vmatmul.mubr.f32.gmra.mrb[0].mxu0 %v944
  %v1334 = vpop.f32.mrb[0].mxu0
  %v1335 = vadd.f32 %v899, %v1334
  %v1336 = vpop.f32.mrb[0].mxu0
  %1337 = vmatprep.mubr.f32.mxu0 0.0
  %1338 = vmatmul.mubr.f32.gmra.mrb[0].mxu0 %v947
  %v1339 = vpop.f32.mrb[0].mxu0
  %v1340 = vadd.f32 %v899, %v1339
  %v1341 = vpop.f32.mrb[0].mxu0
  %1342 = vmatprep.mubr.f32.mxu0 0.0
  %1343 = vmatmul.mubr.f32.gmra.mrb[0].mxu0 %v950
  %v1344 = vpop.f32.mrb[0].mxu0
  %v1345 = vadd.f32 %v899, %v1344
  %v1346 = vpop.f32.mrb[0].mxu0
  %1347 = vmatprep.mubr.f32.mxu0 0.0
  %1348 = vmatmul.mubr.f32.gmra.mrb[0].mxu0 %v953
  %v1349 = vpop.f32.mrb[0].mxu0
  %v1350 = vadd.f32 %v899, %v1349
  %v1351 = vpop.f32.mrb[0].mxu0
  %1352 = vmatprep.mubr.f32.mxu0 0.0
  %1353 = vmatmul.mubr.f32.gmra.mrb[0].mxu0 %v956
  %v1354 = vpop.f32.mrb[0].mxu0
  %v1355 = vadd.f32 %v899, %v1354
  %v1356 = vpop.f32.mrb[0].mxu0
  %1357 = vmatprep.mubr.f32.mxu0 0.0
  %1358 = vmatmul.mubr.f32.gmra.mrb[0].mxu0 %v959
  %v1359 = vpop.f32.mrb[0].mxu0
  %v1360 = vadd.f32 %v899, %v1359
  %v1361 = vpop.f32.mrb[0].mxu0
  %1362 = vmatprep.mubr.f32.mxu0 0.0
  %1363 = vmatmul.mubr.f32.gmra.mrb[0].mxu0 %v962
  %v1364 = vpop.f32.mrb[0].mxu0
  %v1365 = vadd.f32 %v899, %v1364
  %v1366 = vpop.f32.mrb[0].mxu0
  %1367 = vmatprep.mubr.f32.mxu0 0.0
  %1368 = vmatmul.mubr.f32.gmra.mrb[0].mxu0 %v965
  %v1369 = vpop.f32.mrb[0].mxu0
  %v1370 = vadd.f32 %v899, %v1369
  %v1371 = vpop.f32.mrb[0].mxu0
  %1372 = vmatprep.mubr.f32.mxu0 0.0
  %1373 = vmatmul.mubr.f32.gmra.mrb[0].mxu0 %v968
  %v1374 = vpop.f32.mrb[0].mxu0
  %v1375 = vadd.f32 %v899, %v1374
  %v1376 = vpop.f32.mrb[0].mxu0
  %1377 = vmatprep.mubr.f32.mxu0 0.0
  %1378 = vmatmul.mubr.f32.gmra.mrb[0].mxu0 %v971
  %v1379 = vpop.f32.mrb[0].mxu0
  %v1380 = vadd.f32 %v899, %v1379
  %v1381 = vpop.f32.mrb[0].mxu0
  %1382 = vmatprep.mubr.f32.mxu0 0.0
  %1383 = vmatmul.mubr.f32.gmra.mrb[0].mxu0 %v974
  %v1384 = vpop.f32.mrb[0].mxu0
  %v1385 = vadd.f32 %v899, %v1384
  %v1386 = vpop.f32.mrb[0].mxu0
  %1387 = vmatprep.mubr.f32.mxu0 0.0
  %1388 = vmatmul.mubr.f32.gmra.mrb[0].mxu0 %v977
  %v1389 = vpop.f32.mrb[0].mxu0
  %v1390 = vadd.f32 %v899, %v1389
  %v1391 = vpop.f32.mrb[0].mxu0
  %1392 = vmatprep.mubr.f32.mxu0 0.0
  %1393 = vmatmul.mubr.f32.gmra.mrb[0].mxu0 %v980
  %v1394 = vpop.f32.mrb[0].mxu0
  %v1395 = vadd.f32 %v899, %v1394
  %v1396 = vpop.f32.mrb[0].mxu0
  %1397 = vdwg.mxu0
  %v1398 = vmax.f32 %v1049, 0.0
  %v1399 = vmax.f32 %v1051, 0.0
  %v1400 = vmax.f32 %v1270, 0.0
  %v1401 = vmax.f32 %v1055, 0.0
  %v1402 = vmax.f32 %v1057, 0.0
  %v1403 = vmax.f32 %v1275, 0.0
  %v1404 = vmax.f32 %v1061, 0.0
  %v1405 = vmax.f32 %v1063, 0.0
  %v1406 = vmax.f32 %v1280, 0.0
  %v1407 = vmax.f32 %v1067, 0.0
  %v1408 = vmax.f32 %v1069, 0.0
  %v1409 = vmax.f32 %v1285, 0.0
  %v1410 = vmax.f32 %v1073, 0.0
  %v1411 = vmax.f32 %v1075, 0.0
  %v1412 = vmax.f32 %v1290, 0.0
  %v1413 = vmax.f32 %v1079, 0.0
  %v1414 = vmax.f32 %v1081, 0.0
  %v1415 = vmax.f32 %v1295, 0.0
  %v1416 = vmax.f32 %v1085, 0.0
  %v1417 = vmax.f32 %v1087, 0.0
  %v1418 = vmax.f32 %v1300, 0.0
  %v1419 = vmax.f32 %v1091, 0.0
  %v1420 = vmax.f32 %v1093, 0.0
  %v1421 = vmax.f32 %v1305, 0.0
  %v1422 = vmax.f32 %v1097, 0.0
  %v1423 = vmax.f32 %v1099, 0.0
  %v1424 = vmax.f32 %v1310, 0.0
  %v1425 = vmax.f32 %v1103, 0.0
  %v1426 = vmax.f32 %v1105, 0.0
  %v1427 = vmax.f32 %v1315, 0.0
  %v1428 = vmax.f32 %v1109, 0.0
  %v1429 = vmax.f32 %v1111, 0.0
  %v1430 = vmax.f32 %v1320, 0.0
  %v1431 = vmax.f32 %v1115, 0.0
  %v1432 = vmax.f32 %v1117, 0.0
  %v1433 = vmax.f32 %v1325, 0.0
  %v1434 = vmax.f32 %v1121, 0.0
  %v1435 = vmax.f32 %v1123, 0.0
  %v1436 = vmax.f32 %v1330, 0.0
  %v1437 = vmax.f32 %v1127, 0.0
  %v1438 = vmax.f32 %v1129, 0.0
  %v1439 = vmax.f32 %v1335, 0.0
  %v1440 = vmax.f32 %v1133, 0.0
  %v1441 = vmax.f32 %v1135, 0.0
  %v1442 = vmax.f32 %v1340, 0.0
  %v1443 = vmax.f32 %v1139, 0.0
  %v1444 = vmax.f32 %v1141, 0.0
  %v1445 = vmax.f32 %v1345, 0.0
  %v1446 = vmax.f32 %v1145, 0.0
  %v1447 = vmax.f32 %v1147, 0.0
  %v1448 = vmax.f32 %v1350, 0.0
  %v1449 = vmax.f32 %v1151, 0.0
  %v1450 = vmax.f32 %v1153, 0.0
  %v1451 = vmax.f32 %v1355, 0.0
  %v1452 = vmax.f32 %v1157, 0.0
  %v1453 = vmax.f32 %v1159, 0.0
  %v1454 = vmax.f32 %v1360, 0.0
  %v1455 = vmax.f32 %v1163, 0.0
  %v1456 = vmax.f32 %v1165, 0.0
  %v1457 = vmax.f32 %v1365, 0.0
  %v1458 = vmax.f32 %v1169, 0.0
  %v1459 = vmax.f32 %v1171, 0.0
  %v1460 = vmax.f32 %v1370, 0.0
  %v1461 = vmax.f32 %v1175, 0.0
  %v1462 = vmax.f32 %v1177, 0.0
  %v1463 = vmax.f32 %v1375, 0.0
  %v1464 = vmax.f32 %v1181, 0.0
  %v1465 = vmax.f32 %v1183, 0.0
  %v1466 = vmax.f32 %v1380, 0.0
  %v1467 = vmax.f32 %v1187, 0.0
  %v1468 = vmax.f32 %v1189, 0.0
  %v1469 = vmax.f32 %v1385, 0.0
  %v1470 = vmax.f32 %v1193, 0.0
  %v1471 = vmax.f32 %v1195, 0.0
  %v1472 = vmax.f32 %v1390, 0.0
  %v1473 = vmax.f32 %v1199, 0.0
  %v1474 = vmax.f32 %v1201, 0.0
  %v1475 = vmax.f32 %v1395, 0.0
  %v1476 = vld [vmem:[%s7] sm:$0xff]
  %v1477 = vld [vmem:[%s7 + $0x8] sm:$0xff]
  %v1478 = vld [vmem:[%s7 + $0x10] sm:$0xff]
  %v1479 = vld [vmem:[%s7 + $0x18] sm:$0xff]
  %v1480 = vld [vmem:[%s7 + $0x20] sm:$0xff]
  %v1481 = vld [vmem:[%s7 + $0x28] sm:$0xff]
  %v1482 = vld [vmem:[%s7 + $0x30] sm:$0xff]
  %v1483 = vld [vmem:[%s7 + $0x38] sm:$0xff]
  %v1484 = vld [vmem:[%s7 + $0x40] sm:$0xff]
  %v1485 = vld [vmem:[%s7 + $0x48] sm:$0xff]
  %v1486 = vld [vmem:[%s7 + $0x50] sm:$0xff]
  %v1487 = vld [vmem:[%s7 + $0x58] sm:$0xff]
  %v1488 = vld [vmem:[%s7 + $0x60] sm:$0xff]
  %v1489 = vld [vmem:[%s7 + $0x68] sm:$0xff]
  %v1490 = vld [vmem:[%s7 + $0x70] sm:$0xff]
  %v1491 = vld [vmem:[%s7 + $0x78] sm:$0xff]
  %v1492 = vld [vmem:[%s7 + $0x80] sm:$0xff]
  %v1493 = vld [vmem:[%s7 + $0x88] sm:$0xff]
  %v1494 = vld [vmem:[%s7 + $0x90] sm:$0xff]
  %v1495 = vld [vmem:[%s7 + $0x98] sm:$0xff]
  %v1496 = vld [vmem:[%s7 + $0xa0] sm:$0xff]
  %v1497 = vld [vmem:[%s7 + $0xa8] sm:$0xff]
  %v1498 = vld [vmem:[%s7 + $0xb0] sm:$0xff]
  %v1499 = vld [vmem:[%s7 + $0xb8] sm:$0xff]
  %v1500 = vld [vmem:[%s7 + $0xc0] sm:$0xff]
  %v1501 = vld [vmem:[%s7 + $0xc8] sm:$0xff]
  %v1502 = vld [vmem:[%s7 + $0xd0] sm:$0xff]
  %v1503 = vld [vmem:[%s7 + $0xd8] sm:$0xff]
  %v1504 = vld [vmem:[%s7 + $0xe0] sm:$0xff]
  %v1505 = vld [vmem:[%s7 + $0xe8] sm:$0xff]
  %v1506 = vld [vmem:[%s7 + $0xf0] sm:$0xff]
  %v1507 = vld [vmem:[%s7 + $0xf8] sm:$0xff]
  %v1508 = vld [vmem:[%s7 + $0x100] sm:$0xff]
  %v1509 = vld [vmem:[%s7 + $0x108] sm:$0xff]
  %v1510 = vld [vmem:[%s7 + $0x110] sm:$0xff]
  %v1511 = vld [vmem:[%s7 + $0x118] sm:$0xff]
  %v1512 = vld [vmem:[%s7 + $0x120] sm:$0xff]
  %v1513 = vld [vmem:[%s7 + $0x128] sm:$0xff]
  %v1514 = vld [vmem:[%s7 + $0x130] sm:$0xff]
  %v1515 = vld [vmem:[%s7 + $0x138] sm:$0xff]
  %v1516 = vld [vmem:[%s7 + $0x140] sm:$0xff]
  %v1517 = vld [vmem:[%s7 + $0x148] sm:$0xff]
  %v1518 = vld [vmem:[%s7 + $0x150] sm:$0xff]
  %v1519 = vld [vmem:[%s7 + $0x158] sm:$0xff]
  %v1520 = vld [vmem:[%s7 + $0x160] sm:$0xff]
  %v1521 = vld [vmem:[%s7 + $0x168] sm:$0xff]
  %v1522 = vld [vmem:[%s7 + $0x170] sm:$0xff]
  %v1523 = vld [vmem:[%s7 + $0x178] sm:$0xff]
  %v1524 = vld [vmem:[%s8] sm:$0x1]
  %v1526 = vlaneseq
  %v1527 = vshrl.u32 %v1526, 7
  %v1528 = vsub.s32 0, %v1527
  %v1529 = vrot.slane %v1524, %v1528
  %1531 = vmatprep.subr.mxu0 0.0
  %1532 = vmatpush1.msra.mxu0 %v1476
  %1533 = vmatprep.subr.mxu0 0.0
  %1534 = vmatpush1.msra.mxu0 %v1477
  %1535 = vmatprep.subr.mxu0 0.0
  %1536 = vmatpush1.msra.mxu0 %v1478
  %1537 = vmatprep.subr.mxu0 0.0
  %1538 = vmatpush1.msra.mxu0 %v1479
  %1539 = vmatprep.subr.mxu0 0.0
  %1540 = vmatpush1.msra.mxu0 %v1480
  %1541 = vmatprep.subr.mxu0 0.0
  %1542 = vmatpush1.msra.mxu0 %v1481
  %1543 = vmatprep.subr.mxu0 0.0
  %1544 = vmatpush1.msra.mxu0 %v1482
  %1545 = vmatprep.subr.mxu0 0.0
  %1546 = vmatpush1.msra.mxu0 %v1483
  %1547 = vmatprep.subr.mxu0 0.0
  %1548 = vmatpush1.msra.mxu0 %v1484
  %1549 = vmatprep.subr.mxu0 0.0
  %1550 = vmatpush1.msra.mxu0 %v1485
  %1551 = vmatprep.subr.mxu0 0.0
  %1552 = vmatpush1.msra.mxu0 %v1486
  %1553 = vmatprep.subr.mxu0 0.0
  %1554 = vmatpush1.msra.mxu0 %v1487
  %1555 = vmatprep.subr.mxu0 0.0
  %1556 = vmatpush1.msra.mxu0 %v1488
  %1557 = vmatprep.subr.mxu0 0.0
  %1558 = vmatpush1.msra.mxu0 %v1489
  %1559 = vmatprep.subr.mxu0 0.0
  %1560 = vmatpush1.msra.mxu0 %v1490
  %1561 = vmatprep.subr.mxu0 0.0
  %1562 = vmatpush1.msra.mxu0 %v1491
  %1563 = vmatprep.subr.mxu0 0.0
  %1564 = vmatpush1.msra.mxu0 %v1492
  %1565 = vmatprep.subr.mxu0 0.0
  %1566 = vmatpush1.msra.mxu0 %v1493
  %1567 = vmatprep.subr.mxu0 0.0
  %1568 = vmatpush1.msra.mxu0 %v1494
  %1569 = vmatprep.subr.mxu0 0.0
  %1570 = vmatpush1.msra.mxu0 %v1495
  %1571 = vmatprep.subr.mxu0 0.0
  %1572 = vmatpush1.msra.mxu0 %v1496
  %1573 = vmatprep.subr.mxu0 0.0
  %1574 = vmatpush1.msra.mxu0 %v1497
  %1575 = vmatprep.subr.mxu0 0.0
  %1576 = vmatpush1.msra.mxu0 %v1498
  %1577 = vmatprep.subr.mxu0 0.0
  %1578 = vmatpush1.msra.mxu0 %v1499
  %1579 = vmatprep.subr.mxu0 0.0
  %1580 = vmatpush1.msra.mxu0 %v1500
  %1581 = vmatprep.subr.mxu0 0.0
  %1582 = vmatpush1.msra.mxu0 %v1501
  %1583 = vmatprep.subr.mxu0 0.0
  %1584 = vmatpush1.msra.mxu0 %v1502
  %1585 = vmatprep.subr.mxu0 0.0
  %1586 = vmatpush1.msra.mxu0 %v1503
  %1587 = vmatprep.subr.mxu0 0.0
  %1588 = vmatpush1.msra.mxu0 %v1504
  %1589 = vmatprep.subr.mxu0 0.0
  %1590 = vmatpush1.msra.mxu0 %v1505
  %1591 = vmatprep.subr.mxu0 0.0
  %1592 = vmatpush1.msra.mxu0 %v1506
  %1593 = vmatprep.subr.mxu0 0.0
  %1594 = vmatpush1.msra.mxu0 %v1507
  %1595 = vmatprep.mubr.f32.mxu0 %v1399
  %1596 = vmatmul.mubr.f32.gmra.mrb[0].mxu0 %v1398
  %v1597 = vpop.f32.mrb[0].mxu0
  %v1598 = vadd.f32 %v1529, %v1597
  %v1599 = vpop.f32.mrb[0].mxu0
  %1600 = vmatprep.mubr.f32.mxu0 %v1402
  %1601 = vmatmul.mubr.f32.gmra.mrb[0].mxu0 %v1401
  %v1602 = vpop.f32.mrb[0].mxu0
  %v1603 = vadd.f32 %v1529, %v1602
  %v1604 = vpop.f32.mrb[0].mxu0
  %1605 = vmatprep.mubr.f32.mxu0 %v1405
  %1606 = vmatmul.mubr.f32.gmra.mrb[0].mxu0 %v1404
  %v1607 = vpop.f32.mrb[0].mxu0
  %v1608 = vadd.f32 %v1529, %v1607
  %v1609 = vpop.f32.mrb[0].mxu0
  %1610 = vmatprep.mubr.f32.mxu0 %v1408
  %1611 = vmatmul.mubr.f32.gmra.mrb[0].mxu0 %v1407
  %v1612 = vpop.f32.mrb[0].mxu0
  %v1613 = vadd.f32 %v1529, %v1612
  %v1614 = vpop.f32.mrb[0].mxu0
  %1615 = vmatprep.mubr.f32.mxu0 %v1411
  %1616 = vmatmul.mubr.f32.gmra.mrb[0].mxu0 %v1410
  %v1617 = vpop.f32.mrb[0].mxu0
  %v1618 = vadd.f32 %v1529, %v1617
  %v1619 = vpop.f32.mrb[0].mxu0
  %1620 = vmatprep.mubr.f32.mxu0 %v1414
  %1621 = vmatmul.mubr.f32.gmra.mrb[0].mxu0 %v1413
  %v1622 = vpop.f32.mrb[0].mxu0
  %v1623 = vadd.f32 %v1529, %v1622
  %v1624 = vpop.f32.mrb[0].mxu0
  %1625 = vmatprep.mubr.f32.mxu0 %v1417
  %1626 = vmatmul.mubr.f32.gmra.mrb[0].mxu0 %v1416
  %v1627 = vpop.f32.mrb[0].mxu0
  %v1628 = vadd.f32 %v1529, %v1627
  %v1629 = vpop.f32.mrb[0].mxu0
  %1630 = vmatprep.mubr.f32.mxu0 %v1420
  %1631 = vmatmul.mubr.f32.gmra.mrb[0].mxu0 %v1419
  %v1632 = vpop.f32.mrb[0].mxu0
  %v1633 = vadd.f32 %v1529, %v1632
  %v1634 = vpop.f32.mrb[0].mxu0
  %1635 = vmatprep.mubr.f32.mxu0 %v1423
  %1636 = vmatmul.mubr.f32.gmra.mrb[0].mxu0 %v1422
  %v1637 = vpop.f32.mrb[0].mxu0
  %v1638 = vadd.f32 %v1529, %v1637
  %v1639 = vpop.f32.mrb[0].mxu0
  %1640 = vmatprep.mubr.f32.mxu0 %v1426
  %1641 = vmatmul.mubr.f32.gmra.mrb[0].mxu0 %v1425
  %v1642 = vpop.f32.mrb[0].mxu0
  %v1643 = vadd.f32 %v1529, %v1642
  %v1644 = vpop.f32.mrb[0].mxu0
  %1645 = vmatprep.mubr.f32.mxu0 %v1429
  %1646 = vmatmul.mubr.f32.gmra.mrb[0].mxu0 %v1428
  %v1647 = vpop.f32.mrb[0].mxu0
  %v1648 = vadd.f32 %v1529, %v1647
  %v1649 = vpop.f32.mrb[0].mxu0
  %1650 = vmatprep.mubr.f32.mxu0 %v1432
  %1651 = vmatmul.mubr.f32.gmra.mrb[0].mxu0 %v1431
  %v1652 = vpop.f32.mrb[0].mxu0
  %v1653 = vadd.f32 %v1529, %v1652
  %v1654 = vpop.f32.mrb[0].mxu0
  %1655 = vmatprep.mubr.f32.mxu0 %v1435
  %1656 = vmatmul.mubr.f32.gmra.mrb[0].mxu0 %v1434
  %v1657 = vpop.f32.mrb[0].mxu0
  %v1658 = vadd.f32 %v1529, %v1657
  %v1659 = vpop.f32.mrb[0].mxu0
  %1660 = vmatprep.mubr.f32.mxu0 %v1438
  %1661 = vmatmul.mubr.f32.gmra.mrb[0].mxu0 %v1437
  %v1662 = vpop.f32.mrb[0].mxu0
  %v1663 = vadd.f32 %v1529, %v1662
  %v1664 = vpop.f32.mrb[0].mxu0
  %1665 = vmatprep.mubr.f32.mxu0 %v1441
  %1666 = vmatmul.mubr.f32.gmra.mrb[0].mxu0 %v1440
  %v1667 = vpop.f32.mrb[0].mxu0
  %v1668 = vadd.f32 %v1529, %v1667
  %v1669 = vpop.f32.mrb[0].mxu0
  %1670 = vmatprep.mubr.f32.mxu0 %v1444
  %1671 = vmatmul.mubr.f32.gmra.mrb[0].mxu0 %v1443
  %v1672 = vpop.f32.mrb[0].mxu0
  %v1673 = vadd.f32 %v1529, %v1672
  %v1674 = vpop.f32.mrb[0].mxu0
  %1675 = vmatprep.mubr.f32.mxu0 %v1447
  %1676 = vmatmul.mubr.f32.gmra.mrb[0].mxu0 %v1446
  %v1677 = vpop.f32.mrb[0].mxu0
  %v1678 = vadd.f32 %v1529, %v1677
  %v1679 = vpop.f32.mrb[0].mxu0
  %1680 = vmatprep.mubr.f32.mxu0 %v1450
  %1681 = vmatmul.mubr.f32.gmra.mrb[0].mxu0 %v1449
  %v1682 = vpop.f32.mrb[0].mxu0
  %v1683 = vadd.f32 %v1529, %v1682
  %v1684 = vpop.f32.mrb[0].mxu0
  %1685 = vmatprep.mubr.f32.mxu0 %v1453
  %1686 = vmatmul.mubr.f32.gmra.mrb[0].mxu0 %v1452
  %v1687 = vpop.f32.mrb[0].mxu0
  %v1688 = vadd.f32 %v1529, %v1687
  %v1689 = vpop.f32.mrb[0].mxu0
  %1690 = vmatprep.mubr.f32.mxu0 %v1456
  %1691 = vmatmul.mubr.f32.gmra.mrb[0].mxu0 %v1455
  %v1692 = vpop.f32.mrb[0].mxu0
  %v1693 = vadd.f32 %v1529, %v1692
  %v1694 = vpop.f32.mrb[0].mxu0
  %1695 = vmatprep.mubr.f32.mxu0 %v1459
  %1696 = vmatmul.mubr.f32.gmra.mrb[0].mxu0 %v1458
  %v1697 = vpop.f32.mrb[0].mxu0
  %v1698 = vadd.f32 %v1529, %v1697
  %v1699 = vpop.f32.mrb[0].mxu0
  %1700 = vmatprep.mubr.f32.mxu0 %v1462
  %1701 = vmatmul.mubr.f32.gmra.mrb[0].mxu0 %v1461
  %v1702 = vpop.f32.mrb[0].mxu0
  %v1703 = vadd.f32 %v1529, %v1702
  %v1704 = vpop.f32.mrb[0].mxu0
  %1705 = vmatprep.mubr.f32.mxu0 %v1465
  %1706 = vmatmul.mubr.f32.gmra.mrb[0].mxu0 %v1464
  %v1707 = vpop.f32.mrb[0].mxu0
  %v1708 = vadd.f32 %v1529, %v1707
  %v1709 = vpop.f32.mrb[0].mxu0
  %1710 = vmatprep.mubr.f32.mxu0 %v1468
  %1711 = vmatmul.mubr.f32.gmra.mrb[0].mxu0 %v1467
  %v1712 = vpop.f32.mrb[0].mxu0
  %v1713 = vadd.f32 %v1529, %v1712
  %v1714 = vpop.f32.mrb[0].mxu0
  %1715 = vmatprep.mubr.f32.mxu0 %v1471
  %1716 = vmatmul.mubr.f32.gmra.mrb[0].mxu0 %v1470
  %v1717 = vpop.f32.mrb[0].mxu0
  %v1718 = vadd.f32 %v1529, %v1717
  %v1719 = vpop.f32.mrb[0].mxu0
  %1720 = vmatprep.mubr.f32.mxu0 %v1474
  %1721 = vmatmul.mubr.f32.gmra.mrb[0].mxu0 %v1473
  %v1722 = vpop.f32.mrb[0].mxu0
  %v1723 = vadd.f32 %v1529, %v1722
  %v1724 = vpop.f32.mrb[0].mxu0
  %1725 = vdwg.mxu0
  %1726 = vmatprep.subr.mxu0 0.0
  %1727 = vmatpush1.msra.mxu0 %v1508
  %1728 = vmatprep.subr.mxu0 0.0
  %1729 = vmatpush1.msra.mxu0 %v1509
  %1730 = vmatprep.subr.mxu0 0.0
  %1731 = vmatpush1.msra.mxu0 %v1510
  %1732 = vmatprep.subr.mxu0 0.0
  %1733 = vmatpush1.msra.mxu0 %v1511
  %1734 = vmatprep.subr.mxu0 0.0
  %1735 = vmatpush1.msra.mxu0 %v1512
  %1736 = vmatprep.subr.mxu0 0.0
  %1737 = vmatpush1.msra.mxu0 %v1513
  %1738 = vmatprep.subr.mxu0 0.0
  %1739 = vmatpush1.msra.mxu0 %v1514
  %1740 = vmatprep.subr.mxu0 0.0
  %1741 = vmatpush1.msra.mxu0 %v1515
  %1742 = vmatprep.subr.mxu0 0.0
  %1743 = vmatpush1.msra.mxu0 %v1516
  %1744 = vmatprep.subr.mxu0 0.0
  %1745 = vmatpush1.msra.mxu0 %v1517
  %1746 = vmatprep.subr.mxu0 0.0
  %1747 = vmatpush1.msra.mxu0 %v1518
  %1748 = vmatprep.subr.mxu0 0.0
  %1749 = vmatpush1.msra.mxu0 %v1519
  %1750 = vmatprep.subr.mxu0 0.0
  %1751 = vmatpush1.msra.mxu0 %v1520
  %1752 = vmatprep.subr.mxu0 0.0
  %1753 = vmatpush1.msra.mxu0 %v1521
  %1754 = vmatprep.subr.mxu0 0.0
  %1755 = vmatpush1.msra.mxu0 %v1522
  %1756 = vmatprep.subr.mxu0 0.0
  %1757 = vmatpush1.msra.mxu0 %v1523
  %1758 = vmatprep.subr.mxu0 0.0
  %1759 = vmatpush1.msra.mxu0 0.0
  %1760 = vmatprep.subr.mxu0 0.0
  %1761 = vmatpush1.msra.mxu0 0.0
  %1762 = vmatprep.subr.mxu0 0.0
  %1763 = vmatpush1.msra.mxu0 0.0
  %1764 = vmatprep.subr.mxu0 0.0
  %1765 = vmatpush1.msra.mxu0 0.0
  %1766 = vmatprep.subr.mxu0 0.0
  %1767 = vmatpush1.msra.mxu0 0.0
  %1768 = vmatprep.subr.mxu0 0.0
  %1769 = vmatpush1.msra.mxu0 0.0
  %1770 = vmatprep.subr.mxu0 0.0
  %1771 = vmatpush1.msra.mxu0 0.0
  %1772 = vmatprep.subr.mxu0 0.0
  %1773 = vmatpush1.msra.mxu0 0.0
  %1774 = vmatprep.subr.mxu0 0.0
  %1775 = vmatpush1.msra.mxu0 0.0
  %1776 = vmatprep.subr.mxu0 0.0
  %1777 = vmatpush1.msra.mxu0 0.0
  %1778 = vmatprep.subr.mxu0 0.0
  %1779 = vmatpush1.msra.mxu0 0.0
  %1780 = vmatprep.subr.mxu0 0.0
  %1781 = vmatpush1.msra.mxu0 0.0
  %1782 = vmatprep.subr.mxu0 0.0
  %1783 = vmatpush1.msra.mxu0 0.0
  %1784 = vmatprep.subr.mxu0 0.0
  %1785 = vmatpush1.msra.mxu0 0.0
  %1786 = vmatprep.subr.mxu0 0.0
  %1787 = vmatpush1.msra.mxu0 0.0
  %1788 = vmatprep.subr.mxu0 0.0
  %1789 = vmatpush1.msra.mxu0 0.0
  %1790 = vmatprep.mubr.f32.mxu0 0.0
  %1791 = vmatmul.mubr.f32.gmra.mrb[0].mxu0 %v1400
  %v1792 = vpop.f32.mrb[0].mxu0
  %v1793 = vadd.f32 %v1598, %v1792
  %v1794 = vpop.f32.mrb[0].mxu0
  %1795 = vmatprep.mubr.f32.mxu0 0.0
  %1796 = vmatmul.mubr.f32.gmra.mrb[0].mxu0 %v1403
  %v1797 = vpop.f32.mrb[0].mxu0
  %v1798 = vadd.f32 %v1603, %v1797
  %v1799 = vpop.f32.mrb[0].mxu0
  %1800 = vmatprep.mubr.f32.mxu0 0.0
  %1801 = vmatmul.mubr.f32.gmra.mrb[0].mxu0 %v1406
  %v1802 = vpop.f32.mrb[0].mxu0
  %v1803 = vadd.f32 %v1608, %v1802
  %v1804 = vpop.f32.mrb[0].mxu0
  %1805 = vmatprep.mubr.f32.mxu0 0.0
  %1806 = vmatmul.mubr.f32.gmra.mrb[0].mxu0 %v1409
  %v1807 = vpop.f32.mrb[0].mxu0
  %v1808 = vadd.f32 %v1613, %v1807
  %v1809 = vpop.f32.mrb[0].mxu0
  %1810 = vmatprep.mubr.f32.mxu0 0.0
  %1811 = vmatmul.mubr.f32.gmra.mrb[0].mxu0 %v1412
  %v1812 = vpop.f32.mrb[0].mxu0
  %v1813 = vadd.f32 %v1618, %v1812
  %v1814 = vpop.f32.mrb[0].mxu0
  %1815 = vmatprep.mubr.f32.mxu0 0.0
  %1816 = vmatmul.mubr.f32.gmra.mrb[0].mxu0 %v1415
  %v1817 = vpop.f32.mrb[0].mxu0
  %v1818 = vadd.f32 %v1623, %v1817
  %v1819 = vpop.f32.mrb[0].mxu0
  %1820 = vmatprep.mubr.f32.mxu0 0.0
  %1821 = vmatmul.mubr.f32.gmra.mrb[0].mxu0 %v1418
  %v1822 = vpop.f32.mrb[0].mxu0
  %v1823 = vadd.f32 %v1628, %v1822
  %v1824 = vpop.f32.mrb[0].mxu0
  %1825 = vmatprep.mubr.f32.mxu0 0.0
  %1826 = vmatmul.mubr.f32.gmra.mrb[0].mxu0 %v1421
  %v1827 = vpop.f32.mrb[0].mxu0
  %v1828 = vadd.f32 %v1633, %v1827
  %v1829 = vpop.f32.mrb[0].mxu0
  %1830 = vmatprep.mubr.f32.mxu0 0.0
  %1831 = vmatmul.mubr.f32.gmra.mrb[0].mxu0 %v1424
  %v1832 = vpop.f32.mrb[0].mxu0
  %v1833 = vadd.f32 %v1638, %v1832
  %v1834 = vpop.f32.mrb[0].mxu0
  %1835 = vmatprep.mubr.f32.mxu0 0.0
  %1836 = vmatmul.mubr.f32.gmra.mrb[0].mxu0 %v1427
  %v1837 = vpop.f32.mrb[0].mxu0
  %v1838 = vadd.f32 %v1643, %v1837
  %v1839 = vpop.f32.mrb[0].mxu0
  %1840 = vmatprep.mubr.f32.mxu0 0.0
  %1841 = vmatmul.mubr.f32.gmra.mrb[0].mxu0 %v1430
  %v1842 = vpop.f32.mrb[0].mxu0
  %v1843 = vadd.f32 %v1648, %v1842
  %v1844 = vpop.f32.mrb[0].mxu0
  %1845 = vmatprep.mubr.f32.mxu0 0.0
  %1846 = vmatmul.mubr.f32.gmra.mrb[0].mxu0 %v1433
  %v1847 = vpop.f32.mrb[0].mxu0
  %v1848 = vadd.f32 %v1653, %v1847
  %v1849 = vpop.f32.mrb[0].mxu0
  %1850 = vmatprep.mubr.f32.mxu0 0.0
  %1851 = vmatmul.mubr.f32.gmra.mrb[0].mxu0 %v1436
  %v1852 = vpop.f32.mrb[0].mxu0
  %v1853 = vadd.f32 %v1658, %v1852
  %v1854 = vpop.f32.mrb[0].mxu0
  %1855 = vmatprep.mubr.f32.mxu0 0.0
  %1856 = vmatmul.mubr.f32.gmra.mrb[0].mxu0 %v1439
  %v1857 = vpop.f32.mrb[0].mxu0
  %v1858 = vadd.f32 %v1663, %v1857
  %v1859 = vpop.f32.mrb[0].mxu0
  %1860 = vmatprep.mubr.f32.mxu0 0.0
  %1861 = vmatmul.mubr.f32.gmra.mrb[0].mxu0 %v1442
  %v1862 = vpop.f32.mrb[0].mxu0
  %v1863 = vadd.f32 %v1668, %v1862
  %v1864 = vpop.f32.mrb[0].mxu0
  %1865 = vmatprep.mubr.f32.mxu0 0.0
  %1866 = vmatmul.mubr.f32.gmra.mrb[0].mxu0 %v1445
  %v1867 = vpop.f32.mrb[0].mxu0
  %v1868 = vadd.f32 %v1673, %v1867
  %v1869 = vpop.f32.mrb[0].mxu0
  %1870 = vmatprep.mubr.f32.mxu0 0.0
  %1871 = vmatmul.mubr.f32.gmra.mrb[0].mxu0 %v1448
  %v1872 = vpop.f32.mrb[0].mxu0
  %v1873 = vadd.f32 %v1678, %v1872
  %v1874 = vpop.f32.mrb[0].mxu0
  %1875 = vmatprep.mubr.f32.mxu0 0.0
  %1876 = vmatmul.mubr.f32.gmra.mrb[0].mxu0 %v1451
  %v1877 = vpop.f32.mrb[0].mxu0
  %v1878 = vadd.f32 %v1683, %v1877
  %v1879 = vpop.f32.mrb[0].mxu0
  %1880 = vmatprep.mubr.f32.mxu0 0.0
  %1881 = vmatmul.mubr.f32.gmra.mrb[0].mxu0 %v1454
  %v1882 = vpop.f32.mrb[0].mxu0
  %v1883 = vadd.f32 %v1688, %v1882
  %v1884 = vpop.f32.mrb[0].mxu0
  %1885 = vmatprep.mubr.f32.mxu0 0.0
  %1886 = vmatmul.mubr.f32.gmra.mrb[0].mxu0 %v1457
  %v1887 = vpop.f32.mrb[0].mxu0
  %v1888 = vadd.f32 %v1693, %v1887
  %v1889 = vpop.f32.mrb[0].mxu0
  %1890 = vmatprep.mubr.f32.mxu0 0.0
  %1891 = vmatmul.mubr.f32.gmra.mrb[0].mxu0 %v1460
  %v1892 = vpop.f32.mrb[0].mxu0
  %v1893 = vadd.f32 %v1698, %v1892
  %v1894 = vpop.f32.mrb[0].mxu0
  %1895 = vmatprep.mubr.f32.mxu0 0.0
  %1896 = vmatmul.mubr.f32.gmra.mrb[0].mxu0 %v1463
  %v1897 = vpop.f32.mrb[0].mxu0
  %v1898 = vadd.f32 %v1703, %v1897
  %v1899 = vpop.f32.mrb[0].mxu0
  %1900 = vmatprep.mubr.f32.mxu0 0.0
  %1901 = vmatmul.mubr.f32.gmra.mrb[0].mxu0 %v1466
  %v1902 = vpop.f32.mrb[0].mxu0
  %v1903 = vadd.f32 %v1708, %v1902
  %v1904 = vpop.f32.mrb[0].mxu0
  %1905 = vmatprep.mubr.f32.mxu0 0.0
  %1906 = vmatmul.mubr.f32.gmra.mrb[0].mxu0 %v1469
  %v1907 = vpop.f32.mrb[0].mxu0
  %v1908 = vadd.f32 %v1713, %v1907
  %v1909 = vpop.f32.mrb[0].mxu0
  %1910 = vmatprep.mubr.f32.mxu0 0.0
  %1911 = vmatmul.mubr.f32.gmra.mrb[0].mxu0 %v1472
  %v1912 = vpop.f32.mrb[0].mxu0
  %v1913 = vadd.f32 %v1718, %v1912
  %v1914 = vpop.f32.mrb[0].mxu0
  %1915 = vmatprep.mubr.f32.mxu0 0.0
  %1916 = vmatmul.mubr.f32.gmra.mrb[0].mxu0 %v1475
  %v1917 = vpop.f32.mrb[0].mxu0
  %v1918 = vadd.f32 %v1723, %v1917
  %v1919 = vpop.f32.mrb[0].mxu0
  %1920 = vdwg.mxu0
  %vm1921 = vcmp.gt.f32.partialorder %v1793, 20.0
  %vm1922 = vcmp.gt.f32.partialorder %v1798, 20.0
  %vm1923 = vcmp.gt.f32.partialorder %v1803, 20.0
  %vm1924 = vcmp.gt.f32.partialorder %v1808, 20.0
  %vm1925 = vcmp.gt.f32.partialorder %v1813, 20.0
  %vm1926 = vcmp.gt.f32.partialorder %v1818, 20.0
  %vm1927 = vcmp.gt.f32.partialorder %v1823, 20.0
  %vm1928 = vcmp.gt.f32.partialorder %v1828, 20.0
  %vm1929 = vcmp.gt.f32.partialorder %v1833, 20.0
  %vm1930 = vcmp.gt.f32.partialorder %v1838, 20.0
  %vm1931 = vcmp.gt.f32.partialorder %v1843, 20.0
  %vm1932 = vcmp.gt.f32.partialorder %v1848, 20.0
  %vm1933 = vcmp.gt.f32.partialorder %v1853, 20.0
  %vm1934 = vcmp.gt.f32.partialorder %v1858, 20.0
  %vm1935 = vcmp.gt.f32.partialorder %v1863, 20.0
  %vm1936 = vcmp.gt.f32.partialorder %v1868, 20.0
  %vm1937 = vcmp.gt.f32.partialorder %v1873, 20.0
  %vm1938 = vcmp.gt.f32.partialorder %v1878, 20.0
  %vm1939 = vcmp.gt.f32.partialorder %v1883, 20.0
  %vm1940 = vcmp.gt.f32.partialorder %v1888, 20.0
  %vm1941 = vcmp.gt.f32.partialorder %v1893, 20.0
  %vm1942 = vcmp.gt.f32.partialorder %v1898, 20.0
  %vm1943 = vcmp.gt.f32.partialorder %v1903, 20.0
  %vm1944 = vcmp.gt.f32.partialorder %v1908, 20.0
  %vm1945 = vcmp.gt.f32.partialorder %v1913, 20.0
  %vm1946 = vcmp.gt.f32.partialorder %v1918, 20.0
  %v1947 = vmin.f32 %v1793, 20.0
  %v1948 = vmin.f32 %v1798, 20.0
  %v1949 = vmin.f32 %v1803, 20.0
  %v1950 = vmin.f32 %v1808, 20.0
  %v1951 = vmin.f32 %v1813, 20.0
  %v1952 = vmin.f32 %v1818, 20.0
  %v1953 = vmin.f32 %v1823, 20.0
  %v1954 = vmin.f32 %v1828, 20.0
  %v1955 = vmin.f32 %v1833, 20.0
  %v1956 = vmin.f32 %v1838, 20.0
  %v1957 = vmin.f32 %v1843, 20.0
  %v1958 = vmin.f32 %v1848, 20.0
  %v1959 = vmin.f32 %v1853, 20.0
  %v1960 = vmin.f32 %v1858, 20.0
  %v1961 = vmin.f32 %v1863, 20.0
  %v1962 = vmin.f32 %v1868, 20.0
  %v1963 = vmin.f32 %v1873, 20.0
  %v1964 = vmin.f32 %v1878, 20.0
  %v1965 = vmin.f32 %v1883, 20.0
  %v1966 = vmin.f32 %v1888, 20.0
  %v1967 = vmin.f32 %v1893, 20.0
  %v1968 = vmin.f32 %v1898, 20.0
  %v1969 = vmin.f32 %v1903, 20.0
  %v1970 = vmin.f32 %v1908, 20.0
  %v1971 = vmin.f32 %v1913, 20.0
  %v1972 = vmin.f32 %v1918, 20.0
  %v1973 = vmul.f32 %v1947, 1.442695
  %v1974 = vpow.pop %v1973
  %v1975 = vmul.f32 %v1948, 1.442695
  %v1976 = vpow.pop %v1975
  %v1977 = vmul.f32 %v1949, 1.442695
  %v1978 = vpow.pop %v1977
  %v1979 = vmul.f32 %v1950, 1.442695
  %v1980 = vpow.pop %v1979
  %v1981 = vmul.f32 %v1951, 1.442695
  %v1982 = vpow.pop %v1981
  %v1983 = vmul.f32 %v1952, 1.442695
  %v1984 = vpow.pop %v1983
  %v1985 = vmul.f32 %v1953, 1.442695
  %v1986 = vpow.pop %v1985
  %v1987 = vmul.f32 %v1954, 1.442695
  %v1988 = vpow.pop %v1987
  %v1989 = vmul.f32 %v1955, 1.442695
  %v1990 = vpow.pop %v1989
  %v1991 = vmul.f32 %v1956, 1.442695
  %v1992 = vpow.pop %v1991
  %v1993 = vmul.f32 %v1957, 1.442695
  %v1994 = vpow.pop %v1993
  %v1995 = vmul.f32 %v1958, 1.442695
  %v1996 = vpow.pop %v1995
  %v1997 = vmul.f32 %v1959, 1.442695
  %v1998 = vpow.pop %v1997
  %v1999 = vmul.f32 %v1960, 1.442695
  %v2000 = vpow.pop %v1999
  %v2001 = vmul.f32 %v1961, 1.442695
  %v2002 = vpow.pop %v2001
  %v2003 = vmul.f32 %v1962, 1.442695
  %v2004 = vpow.pop %v2003
  %v2005 = vmul.f32 %v1963, 1.442695
  %v2006 = vpow.pop %v2005
  %v2007 = vmul.f32 %v1964, 1.442695
  %v2008 = vpow.pop %v2007
  %v2009 = vmul.f32 %v1965, 1.442695
  %v2010 = vpow.pop %v2009
  %v2011 = vmul.f32 %v1966, 1.442695
  %v2012 = vpow.pop %v2011
  %v2013 = vmul.f32 %v1967, 1.442695
  %v2014 = vpow.pop %v2013
  %v2015 = vmul.f32 %v1968, 1.442695
  %v2016 = vpow.pop %v2015
  %v2017 = vmul.f32 %v1969, 1.442695
  %v2018 = vpow.pop %v2017
  %v2019 = vmul.f32 %v1970, 1.442695
  %v2020 = vpow.pop %v2019
  %v2021 = vmul.f32 %v1971, 1.442695
  %v2022 = vpow.pop %v2021
  %v2023 = vmul.f32 %v1972, 1.442695
  %v2024 = vpow.pop %v2023
  %v2025 = vadd.f32 %v1974, 1.0
  %v2026 = vlog2.pop %v2025
  %v2027 = vmul.f32 %v2026, 0.6931472
  %v2028 = vmul.f32 -0.5, %v1974
  %v2029 = vadd.f32 %v2028, 1.0
  %v2030 = vmul.f32 %v2029, %v1974
  %v2031 = vand.u32 2147483647, %v1974
  %vm2032 = vcmp.lt.f32.partialorder %v2031, 0.0004427343
  %v2033 = vsel %vm2032, %v2030, %v2027
  %v2034 = vadd.f32 %v1976, 1.0
  %v2035 = vlog2.pop %v2034
  %v2036 = vmul.f32 %v2035, 0.6931472
  %v2037 = vmul.f32 -0.5, %v1976
  %v2038 = vadd.f32 %v2037, 1.0
  %v2039 = vmul.f32 %v2038, %v1976
  %v2040 = vand.u32 2147483647, %v1976
  %vm2041 = vcmp.lt.f32.partialorder %v2040, 0.0004427343
  %v2042 = vsel %vm2041, %v2039, %v2036
  %v2043 = vadd.f32 %v1978, 1.0
  %v2044 = vlog2.pop %v2043
  %v2045 = vmul.f32 %v2044, 0.6931472
  %v2046 = vmul.f32 -0.5, %v1978
  %v2047 = vadd.f32 %v2046, 1.0
  %v2048 = vmul.f32 %v2047, %v1978
  %v2049 = vand.u32 2147483647, %v1978
  %vm2050 = vcmp.lt.f32.partialorder %v2049, 0.0004427343
  %v2051 = vsel %vm2050, %v2048, %v2045
  %v2052 = vadd.f32 %v1980, 1.0
  %v2053 = vlog2.pop %v2052
  %v2054 = vmul.f32 %v2053, 0.6931472
  %v2055 = vmul.f32 -0.5, %v1980
  %v2056 = vadd.f32 %v2055, 1.0
  %v2057 = vmul.f32 %v2056, %v1980
  %v2058 = vand.u32 2147483647, %v1980
  %vm2059 = vcmp.lt.f32.partialorder %v2058, 0.0004427343
  %v2060 = vsel %vm2059, %v2057, %v2054
  %v2061 = vadd.f32 %v1982, 1.0
  %v2062 = vlog2.pop %v2061
  %v2063 = vmul.f32 %v2062, 0.6931472
  %v2064 = vmul.f32 -0.5, %v1982
  %v2065 = vadd.f32 %v2064, 1.0
  %v2066 = vmul.f32 %v2065, %v1982
  %v2067 = vand.u32 2147483647, %v1982
  %vm2068 = vcmp.lt.f32.partialorder %v2067, 0.0004427343
  %v2069 = vsel %vm2068, %v2066, %v2063
  %v2070 = vadd.f32 %v1984, 1.0
  %v2071 = vlog2.pop %v2070
  %v2072 = vmul.f32 %v2071, 0.6931472
  %v2073 = vmul.f32 -0.5, %v1984
  %v2074 = vadd.f32 %v2073, 1.0
  %v2075 = vmul.f32 %v2074, %v1984
  %v2076 = vand.u32 2147483647, %v1984
  %vm2077 = vcmp.lt.f32.partialorder %v2076, 0.0004427343
  %v2078 = vsel %vm2077, %v2075, %v2072
  %v2079 = vadd.f32 %v1986, 1.0
  %v2080 = vlog2.pop %v2079
  %v2081 = vmul.f32 %v2080, 0.6931472
  %v2082 = vmul.f32 -0.5, %v1986
  %v2083 = vadd.f32 %v2082, 1.0
  %v2084 = vmul.f32 %v2083, %v1986
  %v2085 = vand.u32 2147483647, %v1986
  %vm2086 = vcmp.lt.f32.partialorder %v2085, 0.0004427343
  %v2087 = vsel %vm2086, %v2084, %v2081
  %v2088 = vadd.f32 %v1988, 1.0
  %v2089 = vlog2.pop %v2088
  %v2090 = vmul.f32 %v2089, 0.6931472
  %v2091 = vmul.f32 -0.5, %v1988
  %v2092 = vadd.f32 %v2091, 1.0
  %v2093 = vmul.f32 %v2092, %v1988
  %v2094 = vand.u32 2147483647, %v1988
  %vm2095 = vcmp.lt.f32.partialorder %v2094, 0.0004427343
  %v2096 = vsel %vm2095, %v2093, %v2090
  %v2097 = vadd.f32 %v1990, 1.0
  %v2098 = vlog2.pop %v2097
  %v2099 = vmul.f32 %v2098, 0.6931472
  %v2100 = vmul.f32 -0.5, %v1990
  %v2101 = vadd.f32 %v2100, 1.0
  %v2102 = vmul.f32 %v2101, %v1990
  %v2103 = vand.u32 2147483647, %v1990
  %vm2104 = vcmp.lt.f32.partialorder %v2103, 0.0004427343
  %v2105 = vsel %vm2104, %v2102, %v2099
  %v2106 = vadd.f32 %v1992, 1.0
  %v2107 = vlog2.pop %v2106
  %v2108 = vmul.f32 %v2107, 0.6931472
  %v2109 = vmul.f32 -0.5, %v1992
  %v2110 = vadd.f32 %v2109, 1.0
  %v2111 = vmul.f32 %v2110, %v1992
  %v2112 = vand.u32 2147483647, %v1992
  %vm2113 = vcmp.lt.f32.partialorder %v2112, 0.0004427343
  %v2114 = vsel %vm2113, %v2111, %v2108
  %v2115 = vadd.f32 %v1994, 1.0
  %v2116 = vlog2.pop %v2115
  %v2117 = vmul.f32 %v2116, 0.6931472
  %v2118 = vmul.f32 -0.5, %v1994
  %v2119 = vadd.f32 %v2118, 1.0
  %v2120 = vmul.f32 %v2119, %v1994
  %v2121 = vand.u32 2147483647, %v1994
  %vm2122 = vcmp.lt.f32.partialorder %v2121, 0.0004427343
  %v2123 = vsel %vm2122, %v2120, %v2117
  %v2124 = vadd.f32 %v1996, 1.0
  %v2125 = vlog2.pop %v2124
  %v2126 = vmul.f32 %v2125, 0.6931472
  %v2127 = vmul.f32 -0.5, %v1996
  %v2128 = vadd.f32 %v2127, 1.0
  %v2129 = vmul.f32 %v2128, %v1996
  %v2130 = vand.u32 2147483647, %v1996
  %vm2131 = vcmp.lt.f32.partialorder %v2130, 0.0004427343
  %v2132 = vsel %vm2131, %v2129, %v2126
  %v2133 = vadd.f32 %v1998, 1.0
  %v2134 = vlog2.pop %v2133
  %v2135 = vmul.f32 %v2134, 0.6931472
  %v2136 = vmul.f32 -0.5, %v1998
  %v2137 = vadd.f32 %v2136, 1.0
  %v2138 = vmul.f32 %v2137, %v1998
  %v2139 = vand.u32 2147483647, %v1998
  %vm2140 = vcmp.lt.f32.partialorder %v2139, 0.0004427343
  %v2141 = vsel %vm2140, %v2138, %v2135
  %v2142 = vadd.f32 %v2000, 1.0
  %v2143 = vlog2.pop %v2142
  %v2144 = vmul.f32 %v2143, 0.6931472
  %v2145 = vmul.f32 -0.5, %v2000
  %v2146 = vadd.f32 %v2145, 1.0
  %v2147 = vmul.f32 %v2146, %v2000
  %v2148 = vand.u32 2147483647, %v2000
  %vm2149 = vcmp.lt.f32.partialorder %v2148, 0.0004427343
  %v2150 = vsel %vm2149, %v2147, %v2144
  %v2151 = vadd.f32 %v2002, 1.0
  %v2152 = vlog2.pop %v2151
  %v2153 = vmul.f32 %v2152, 0.6931472
  %v2154 = vmul.f32 -0.5, %v2002
  %v2155 = vadd.f32 %v2154, 1.0
  %v2156 = vmul.f32 %v2155, %v2002
  %v2157 = vand.u32 2147483647, %v2002
  %vm2158 = vcmp.lt.f32.partialorder %v2157, 0.0004427343
  %v2159 = vsel %vm2158, %v2156, %v2153
  %v2160 = vadd.f32 %v2004, 1.0
  %v2161 = vlog2.pop %v2160
  %v2162 = vmul.f32 %v2161, 0.6931472
  %v2163 = vmul.f32 -0.5, %v2004
  %v2164 = vadd.f32 %v2163, 1.0
  %v2165 = vmul.f32 %v2164, %v2004
  %v2166 = vand.u32 2147483647, %v2004
  %vm2167 = vcmp.lt.f32.partialorder %v2166, 0.0004427343
  %v2168 = vsel %vm2167, %v2165, %v2162
  %v2169 = vadd.f32 %v2006, 1.0
  %v2170 = vlog2.pop %v2169
  %v2171 = vmul.f32 %v2170, 0.6931472
  %v2172 = vmul.f32 -0.5, %v2006
  %v2173 = vadd.f32 %v2172, 1.0
  %v2174 = vmul.f32 %v2173, %v2006
  %v2175 = vand.u32 2147483647, %v2006
  %vm2176 = vcmp.lt.f32.partialorder %v2175, 0.0004427343
  %v2177 = vsel %vm2176, %v2174, %v2171
  %v2178 = vadd.f32 %v2008, 1.0
  %v2179 = vlog2.pop %v2178
  %v2180 = vmul.f32 %v2179, 0.6931472
  %v2181 = vmul.f32 -0.5, %v2008
  %v2182 = vadd.f32 %v2181, 1.0
  %v2183 = vmul.f32 %v2182, %v2008
  %v2184 = vand.u32 2147483647, %v2008
  %vm2185 = vcmp.lt.f32.partialorder %v2184, 0.0004427343
  %v2186 = vsel %vm2185, %v2183, %v2180
  %v2187 = vadd.f32 %v2010, 1.0
  %v2188 = vlog2.pop %v2187
  %v2189 = vmul.f32 %v2188, 0.6931472
  %v2190 = vmul.f32 -0.5, %v2010
  %v2191 = vadd.f32 %v2190, 1.0
  %v2192 = vmul.f32 %v2191, %v2010
  %v2193 = vand.u32 2147483647, %v2010
  %vm2194 = vcmp.lt.f32.partialorder %v2193, 0.0004427343
  %v2195 = vsel %vm2194, %v2192, %v2189
  %v2196 = vadd.f32 %v2012, 1.0
  %v2197 = vlog2.pop %v2196
  %v2198 = vmul.f32 %v2197, 0.6931472
  %v2199 = vmul.f32 -0.5, %v2012
  %v2200 = vadd.f32 %v2199, 1.0
  %v2201 = vmul.f32 %v2200, %v2012
  %v2202 = vand.u32 2147483647, %v2012
  %vm2203 = vcmp.lt.f32.partialorder %v2202, 0.0004427343
  %v2204 = vsel %vm2203, %v2201, %v2198
  %v2205 = vadd.f32 %v2014, 1.0
  %v2206 = vlog2.pop %v2205
  %v2207 = vmul.f32 %v2206, 0.6931472
  %v2208 = vmul.f32 -0.5, %v2014
  %v2209 = vadd.f32 %v2208, 1.0
  %v2210 = vmul.f32 %v2209, %v2014
  %v2211 = vand.u32 2147483647, %v2014
  %vm2212 = vcmp.lt.f32.partialorder %v2211, 0.0004427343
  %v2213 = vsel %vm2212, %v2210, %v2207
  %v2214 = vadd.f32 %v2016, 1.0
  %v2215 = vlog2.pop %v2214
  %v2216 = vmul.f32 %v2215, 0.6931472
  %v2217 = vmul.f32 -0.5, %v2016
  %v2218 = vadd.f32 %v2217, 1.0
  %v2219 = vmul.f32 %v2218, %v2016
  %v2220 = vand.u32 2147483647, %v2016
  %vm2221 = vcmp.lt.f32.partialorder %v2220, 0.0004427343
  %v2222 = vsel %vm2221, %v2219, %v2216
  %v2223 = vadd.f32 %v2018, 1.0
  %v2224 = vlog2.pop %v2223
  %v2225 = vmul.f32 %v2224, 0.6931472
  %v2226 = vmul.f32 -0.5, %v2018
  %v2227 = vadd.f32 %v2226, 1.0
  %v2228 = vmul.f32 %v2227, %v2018
  %v2229 = vand.u32 2147483647, %v2018
  %vm2230 = vcmp.lt.f32.partialorder %v2229, 0.0004427343
  %v2231 = vsel %vm2230, %v2228, %v2225
  %v2232 = vadd.f32 %v2020, 1.0
  %v2233 = vlog2.pop %v2232
  %v2234 = vmul.f32 %v2233, 0.6931472
  %v2235 = vmul.f32 -0.5, %v2020
  %v2236 = vadd.f32 %v2235, 1.0
  %v2237 = vmul.f32 %v2236, %v2020
  %v2238 = vand.u32 2147483647, %v2020
  %vm2239 = vcmp.lt.f32.partialorder %v2238, 0.0004427343
  %v2240 = vsel %vm2239, %v2237, %v2234
  %v2241 = vadd.f32 %v2022, 1.0
  %v2242 = vlog2.pop %v2241
  %v2243 = vmul.f32 %v2242, 0.6931472
  %v2244 = vmul.f32 -0.5, %v2022
  %v2245 = vadd.f32 %v2244, 1.0
  %v2246 = vmul.f32 %v2245, %v2022
  %v2247 = vand.u32 2147483647, %v2022
  %vm2248 = vcmp.lt.f32.partialorder %v2247, 0.0004427343
  %v2249 = vsel %vm2248, %v2246, %v2243
  %v2250 = vadd.f32 %v2024, 1.0
  %v2251 = vlog2.pop %v2250
  %v2252 = vmul.f32 %v2251, 0.6931472
  %v2253 = vmul.f32 -0.5, %v2024
  %v2254 = vadd.f32 %v2253, 1.0
  %v2255 = vmul.f32 %v2254, %v2024
  %v2256 = vand.u32 2147483647, %v2024
  %vm2257 = vcmp.lt.f32.partialorder %v2256, 0.0004427343
  %v2258 = vsel %vm2257, %v2255, %v2252
  %v2259 = vsel %vm1921, %v1793, %v2033
  %v2260 = vsel %vm1922, %v1798, %v2042
  %v2261 = vsel %vm1923, %v1803, %v2051
  %v2262 = vsel %vm1924, %v1808, %v2060
  %v2263 = vsel %vm1925, %v1813, %v2069
  %v2264 = vsel %vm1926, %v1818, %v2078
  %v2265 = vsel %vm1927, %v1823, %v2087
  %v2266 = vsel %vm1928, %v1828, %v2096
  %v2267 = vsel %vm1929, %v1833, %v2105
  %v2268 = vsel %vm1930, %v1838, %v2114
  %v2269 = vsel %vm1931, %v1843, %v2123
  %v2270 = vsel %vm1932, %v1848, %v2132
  %v2271 = vsel %vm1933, %v1853, %v2141
  %v2272 = vsel %vm1934, %v1858, %v2150
  %v2273 = vsel %vm1935, %v1863, %v2159
  %v2274 = vsel %vm1936, %v1868, %v2168
  %v2275 = vsel %vm1937, %v1873, %v2177
  %v2276 = vsel %vm1938, %v1878, %v2186
  %v2277 = vsel %vm1939, %v1883, %v2195
  %v2278 = vsel %vm1940, %v1888, %v2204
  %v2279 = vsel %vm1941, %v1893, %v2213
  %v2280 = vsel %vm1942, %v1898, %v2222
  %v2281 = vsel %vm1943, %v1903, %v2231
  %v2282 = vsel %vm1944, %v1908, %v2240
  %v2283 = vsel %vm1945, %v1913, %v2249
  %v2284 = vsel %vm1946, %v1918, %v2258
  %vm2285 = vcmask 64512
  %2286 = vst.msk [vmem:[%s9] sm:$0xff] %vm2285, %v2259
  %2287 = vst.msk [vmem:[%s9 + $0x8] sm:$0xff] %vm2285, %v2260
  %2288 = vst.msk [vmem:[%s9 + $0x10] sm:$0xff] %vm2285, %v2261
  %2289 = vst.msk [vmem:[%s9 + $0x18] sm:$0xff] %vm2285, %v2262
  %2290 = vst.msk [vmem:[%s9 + $0x20] sm:$0xff] %vm2285, %v2263
  %2291 = vst.msk [vmem:[%s9 + $0x28] sm:$0xff] %vm2285, %v2264
  %2292 = vst.msk [vmem:[%s9 + $0x30] sm:$0xff] %vm2285, %v2265
  %2293 = vst.msk [vmem:[%s9 + $0x38] sm:$0xff] %vm2285, %v2266
  %2294 = vst.msk [vmem:[%s9 + $0x40] sm:$0xff] %vm2285, %v2267
  %2295 = vst.msk [vmem:[%s9 + $0x48] sm:$0xff] %vm2285, %v2268
  %2296 = vst.msk [vmem:[%s9 + $0x50] sm:$0xff] %vm2285, %v2269
  %2297 = vst.msk [vmem:[%s9 + $0x58] sm:$0xff] %vm2285, %v2270
  %2298 = vst.msk [vmem:[%s9 + $0x60] sm:$0xff] %vm2285, %v2271
  %2299 = vst.msk [vmem:[%s9 + $0x68] sm:$0xff] %vm2285, %v2272
  %2300 = vst.msk [vmem:[%s9 + $0x70] sm:$0xff] %vm2285, %v2273
  %2301 = vst.msk [vmem:[%s9 + $0x78] sm:$0xff] %vm2285, %v2274
  %2302 = vst.msk [vmem:[%s9 + $0x80] sm:$0xff] %vm2285, %v2275
  %2303 = vst.msk [vmem:[%s9 + $0x88] sm:$0xff] %vm2285, %v2276
  %2304 = vst.msk [vmem:[%s9 + $0x90] sm:$0xff] %vm2285, %v2277
  %2305 = vst.msk [vmem:[%s9 + $0x98] sm:$0xff] %vm2285, %v2278
  %2306 = vst.msk [vmem:[%s9 + $0xa0] sm:$0xff] %vm2285, %v2279
  %2307 = vst.msk [vmem:[%s9 + $0xa8] sm:$0xff] %vm2285, %v2280
  %2308 = vst.msk [vmem:[%s9 + $0xb0] sm:$0xff] %vm2285, %v2281
  %2309 = vst.msk [vmem:[%s9 + $0xb8] sm:$0xff] %vm2285, %v2282
  %2310 = vst.msk [vmem:[%s9 + $0xc0] sm:$0xff] %vm2285, %v2283
  %2311 = vst.msk [vmem:[%s9 + $0xc8] sm:$0xff] %vm2285, %v2284
  // Predicated region
  $region38: #{tline_forward.1} parent=0 // pred_check
    _
  $region39: #{tline_forward.1} parent=0 // pred_check_branch
    %2313 = sbr.rel (0) target = $region41
  $region40: #{tline_forward.1} parent=0 // pred_region
    _
  $region41: #{tline_forward.1} parent=0 // pred_fallthru
    _
  // Predicated region
  $region42: #{tline_forward.1} parent=0 // pred_check
    _
  $region43: #{tline_forward.1} parent=0 // pred_check_branch
    %2315 = sbr.rel (0) target = $region45
  $region44: #{tline_forward.1} parent=0 // pred_region
    _
  $region45: #{tline_forward.1} parent=0 // pred_fallthru
    _

</llo_original>
